<compile_context>
chip_gen: v5e
topology: v5e:2x2
jax: 0.10.0
libtpu: 0.0.40
codegen_flags: <defaults>
</compile_context>

<pallas_src>
import functools

import numpy as np
import jax
import jax.numpy as jnp
from jax.experimental import pallas as pl
from jax.experimental.pallas import tpu as pltpu

DEC_RAW = 7 * 7 * 64          # 3136
DEC_PAD = 3200                # next multiple of 128 -> unmasked stores / full MXU N tiles


# ----------------------------------------------------------------------------- kernel
def _resnet_depth_map_kernel(
    pooled_ref,                       # (B, K)        bf16, K = 1024*2*2
    w_conv_ref,                       # (K, D)        bf16
    w_s1f_ref,                        # (D, 2D)       bf16  = [w_p1 | 0]
    w_s1h_ref,                        # (D+3, 2D)     bf16  = [0 | w_z1]
    b_s1_ref,                         # (1, 2D)       f32   = [b_p1 | b_z1]
    w_s2_ref,                         # (2D, 2D)      bf16  = blockdiag(w_p2, w_z2)
    b_s2_ref,                         # (1, 2D)       f32   = [b_p2 | b_z2]
    ht_ref,                           # (B, D+3)      f32   = concat(h_n, T_z)
    c_ref,                            # (B, D)        f32
    w_lstm_ref,                       # (2D, 4D)      bf16  = [w_ih.T ; w_hh.T], gates i,f,g,o
    b_lstm_ref,                       # (1, 4D)       f32   = b_ih + b_hh
    w_dec_ref, b_dec_ref,             # (D, 3200) bf16, (1, 3200) f32
    dec_ref, h_out_ref, c_out_ref,    # outputs: (B, 3200), (B, D), (B, D)  all f32
    *, d,
):
    f32 = jnp.float32
    bf16 = jnp.bfloat16

    # ---- Conv2d(1024->D, k=2, no bias) + AdaptiveAvgPool2d((1,1)) + Flatten
    # (exact: both are linear, so the 2x2 patch mean is taken in the wrapper BEFORE the matmul)
    feat = jnp.dot(pooled_ref[...], w_conv_ref[...], preferred_element_type=f32)     # (B, D)

    # ---- stage 1: block-diag fusion of projection Linear-1 and z_transform Linear-1.
    # K-split (feat rows / ht rows) -> two matmuls, no in-kernel lane concat:
    #   cols [0:D)  = Dropout(eval)=id; relu(feat @ w_p1 + b_p1)
    #   cols [D:2D) = relu(ht @ w_z1 + b_z1)
    s1 = jnp.maximum(
        jnp.dot(feat.astype(bf16), w_s1f_ref[...], preferred_element_type=f32)
        + jnp.dot(ht_ref[...].astype(bf16), w_s1h_ref[...], preferred_element_type=f32)
        + b_s1_ref[...], 0.0)                                                         # (B, 2D)

    # ---- stage 2: blockdiag(w_p2, w_z2).  Output IS concat(x, h_prev) -> feeds LSTM directly.
    xh = jnp.maximum(
        jnp.dot(s1.astype(bf16), w_s2_ref[...], preferred_element_type=f32)
        + b_s2_ref[...], 0.0)                                                         # (B, 2D)

    # ---- LSTMCell(x, (h_prev, c)) : single lane-dense gate matmul (PyTorch order i,f,g,o).
    gates = (jnp.dot(xh.astype(bf16), w_lstm_ref[...], preferred_element_type=f32)
             + b_lstm_ref[...])                                                       # (B, 4D)
    sig = jax.nn.sigmoid(gates)     # full-128-lane EUP sweeps, gates picked by static slices
    tnh = jnp.tanh(gates)
    i_g = sig[:, 0 * d:1 * d]
    f_g = sig[:, 1 * d:2 * d]
    g_g = tnh[:, 2 * d:3 * d]
    o_g = sig[:, 3 * d:4 * d]
    c_new = f_g * c_ref[...] + i_g * g_g
    h_new = o_g * jnp.tanh(c_new)

    # ---- dec_input: Linear(D -> 7*7*64, zero-padded to 3200 lanes) + ReLU
    dec_ref[...] = jnp.maximum(
        jnp.dot(h_new.astype(bf16), w_dec_ref[...], preferred_element_type=f32)
        + b_dec_ref[...], 0.0)

    h_out_ref[...] = h_new
    c_out_ref[...] = c_new


# ----------------------------------------------------------------------------- wrapper
@functools.partial(jax.jit, static_argnames=("bottleneck_dim",))
def resnet_depth_map_forward(params, rgb_img, depth_img, dx, dy, dtheta, hc,
                             *, bottleneck_dim):
    B = rgb_img.shape[0]
    D = bottleneck_dim
    f32, bf16 = jnp.float32, jnp.bfloat16

    # -------- encoder stand-in (glue, not the hot path)
    # TODO(synk): RGBDepthEncoder not provided; deterministic 1x1-proj + avgpool stand-in.
    img = jnp.concatenate([rgb_img, depth_img], axis=1).astype(f32)        # (B, 4, H, W)
    H = img.shape[2]
    Hf = 4                                                                 # feature spatial
    s = H // Hf
    img_p = img.reshape(B, 4, Hf, s, Hf, s).mean(axis=(3, 5))              # (B, 4, Hf, Hf)

    # -------- pre-pool for the k=2 projection conv, collapsed into ONE einsum.
    # pool_mat[s, p] averages feat[..., kh+i, kw+j] over output positions for tap p=kh*2+kw;
    # the encoder 1x1-projection (4->1024) is folded into the same contraction (all linear).
    Ho = Wo = Hf - 1
    pm = np.zeros((Hf * Hf, 4), np.float32)
    for kh in range(2):
        for kw in range(2):
            for i in range(Ho):
                for j in range(Wo):
                    pm[(kh + i) * Hf + (kw + j), kh * 2 + kw] += 1.0 / (Ho * Wo)
    pool_mat = jnp.asarray(pm)
    pooled = jnp.einsum("bcs,sp,co->bop",
                        img_p.reshape(B, 4, Hf * Hf), pool_mat, params["enc_w"]
                        ).reshape(B, -1).astype(bf16)                      # (B, 4096) bf16

    # -------- glue for recurrent branch
    T_z = jnp.stack((dx, dy, dtheta), axis=1).astype(f32)                  # (B, 3)
    h_n, c_n = hc
    ht = jnp.concatenate([h_n.astype(f32), T_z], axis=1)                   # (B, D+3)
    c_in = c_n.astype(f32)

    operands = (
        pooled, params["w_conv"],
        params["w_s1f"], params["w_s1h"], params["b_s1"],
        params["w_s2"], params["b_s2"],
        ht, c_in,
        params["w_lstm"], params["b_lstm"],
        params["w_dec"], params["b_dec"],
    )

    # cost hint so XLA overlaps the encoder/pooling glue around the custom call
    K = pooled.shape[1]
    flops = 2 * B * (K * D + (2 * D + D + 3) * 2 * D + 2 * D * 2 * D
                     + 2 * D * 4 * D + D * DEC_PAD)
    in_bytes = sum(int(a.size) * jnp.dtype(a.dtype).itemsize for a in operands)
    out_bytes = (B * DEC_PAD + 2 * B * D) * 4
    cost = pl.CostEstimate(flops=int(flops), transcendentals=int(9 * B * D),
                           bytes_accessed=int(in_bytes + out_bytes))

    # NOTE: at D=32 total VMEM use is ~2 MiB even with lane padding of the (., D) weights;
    # for large bottleneck_dim, tile w_conv over K / w_dec over N (see header TODO).
    vmem = pl.BlockSpec(memory_space=pltpu.MemorySpace.VMEM)
    dec_pad, h_new, c_new = pl.pallas_call(
        functools.partial(_resnet_depth_map_kernel, d=D),
        out_shape=(
            jax.ShapeDtypeStruct((B, DEC_PAD), f32),
            jax.ShapeDtypeStruct((B, D), f32),
            jax.ShapeDtypeStruct((B, D), f32),
        ),
        in_specs=[vmem] * len(operands),
        out_specs=(vmem, vmem, vmem),
        input_output_aliases={8: 2},      # c_in (operand 8) -> c_out (output 2)
        cost_estimate=cost,
    )(*operands)

    dec = dec_pad[:, :DEC_RAW]
    x_map = dec.reshape(B, 64, 7, 7)
    # TODO(synk): MapDecoder not provided; returning the (B,64,7,7) dec_input feature map.
    return x_map, (h_new, c_new)


# ----------------------------------------------------------------------------- params
def init_params(key, bottleneck_dim):
    D = bottleneck_dim
    K = 1024 * 2 * 2
    ks = jax.random.split(key, 16)
    f32, bf16 = jnp.float32, jnp.bfloat16

    def n(k, shape, dtype=bf16, scale=0.02):
        return (scale * jax.random.normal(k, shape, dtype=f32)).astype(dtype)

    # ---- per-layer weights in matmul-ready (in, out) layout -------------------------
    # (from torch: Linear.weight.T ; Conv2d weight (D,1024,2,2) -> reshape(D,4096).T)
    w_p1, b_p1 = n(ks[2], (D, D)), n(ks[3], (1, D), dtype=f32)
    w_p2, b_p2 = n(ks[4], (D, D)), n(ks[5], (1, D), dtype=f32)
    w_z1, b_z1 = n(ks[6], (D + 3, D)), n(ks[7], (1, D), dtype=f32)
    w_z2, b_z2 = n(ks[8], (D, D)), n(ks[9], (1, D), dtype=f32)
    # LSTMCell: torch weight_ih/(weight_hh) are (4D, D), gate order i,f,g,o; stored transposed.
    w_ih = n(ks[10], (D, 4 * D))
    w_hh = n(ks[11], (D, 4 * D))
    b_lstm = (n(ks[12], (1, 4 * D), dtype=f32) + n(ks[13], (1, 4 * D), dtype=f32))

    zDD = jnp.zeros((D, D), bf16)
    zHD = jnp.zeros((D + 3, D), bf16)

    # dec_input weight/bias padded 3136 -> 3200 columns with zeros (exact after slice-back)
    w_dec = jnp.pad(n(ks[14], (D, DEC_RAW)), ((0, 0), (0, DEC_PAD - DEC_RAW)))
    b_dec = jnp.pad(n(ks[15], (1, DEC_RAW), dtype=f32),
                    ((0, 0), (0, DEC_PAD - DEC_RAW)))

    return {
        # encoder stand-in 1x1 projection (4 -> 1024 channels)
        "enc_w": n(ks[0], (4, 1024), dtype=f32),
        # projection conv (row index = c*4 + kh*2 + kw, matching the wrapper's pooled layout)
        "w_conv": n(ks[1], (K, D)),
        # stage-1 block-diag (K-split): feat rows -> [w_p1 | 0], ht rows -> [0 | w_z1]
        "w_s1f": jnp.concatenate([w_p1, zDD], axis=1),
        "w_s1h": jnp.concatenate([zHD, w_z1], axis=1),
        "b_s1": jnp.concatenate([b_p1, b_z1], axis=1),
        # stage-2 block-diag: blockdiag(w_p2, w_z2)
        "w_s2": jnp.concatenate(
            [jnp.concatenate([w_p2, zDD], axis=1),
             jnp.concatenate([zDD, w_z2], axis=1)], axis=0),
        "b_s2": jnp.concatenate([b_p2, b_z2], axis=1),
        # fused LSTM gate matmul: rows 0:D = w_ih.T, rows D:2D = w_hh.T; bias = b_ih + b_hh
        "w_lstm": jnp.concatenate([w_ih, w_hh], axis=0),
        "b_lstm": b_lstm,
        # dec_input (torch (3136, D) stored transposed as (D, 3200) with zero pad)
        "w_dec": w_dec, "b_dec": b_dec,
    }


# ----------------------------------------------------------------------------- main
if __name__ == "__main__":
    B = 2
    D = 32            # bottleneck_dim (small)
    H = W = 16        # small image spatial

    key = jax.random.PRNGKey(0)
    kp, k1, k2, k3, k4, k5 = jax.random.split(key, 6)

    params = init_params(kp, D)

    rgb = jax.random.normal(k1, (B, 3, H, W), dtype=jnp.float32)
    depth = jax.random.normal(k2, (B, 1, H, W), dtype=jnp.float32)
    dx = jax.random.normal(k3, (B,), dtype=jnp.float32)
    dy = jax.random.normal(k4, (B,), dtype=jnp.float32)
    dtheta = jax.random.normal(k5, (B,), dtype=jnp.float32)
    hc = (jnp.zeros((B, D), jnp.float32), jnp.zeros((B, D), jnp.float32))  # init_hidden_state

    x_map, (h_n, c_n) = resnet_depth_map_forward(
        params, rgb, depth, dx, dy, dtheta, hc, bottleneck_dim=D)
    jax.block_until_ready((x_map, h_n, c_n))

    assert x_map.shape == (B, 64, 7, 7)
    assert h_n.shape == (B, D) and c_n.shape == (B, D)
    assert bool(jnp.all(jnp.isfinite(x_map)))
    assert bool(jnp.all(jnp.isfinite(h_n))) and bool(jnp.all(jnp.isfinite(c_n)))
    print("KERNEL_OK")
</pallas_src>

<mosaic_0001>
module attributes {stable_mosaic.version = 11 : i64} {
  func.func @_resnet_depth_map_kernel(%arg0: memref<2x4096xbf16, #tpu.memory_space<vmem>>, %arg1: memref<4096x32xbf16, #tpu.memory_space<vmem>>, %arg2: memref<32x64xbf16, #tpu.memory_space<vmem>>, %arg3: memref<35x64xbf16, #tpu.memory_space<vmem>>, %arg4: memref<1x64xf32, #tpu.memory_space<vmem>>, %arg5: memref<64x64xbf16, #tpu.memory_space<vmem>>, %arg6: memref<1x64xf32, #tpu.memory_space<vmem>>, %arg7: memref<2x35xf32, #tpu.memory_space<vmem>>, %arg8: memref<2x32xf32, #tpu.memory_space<vmem>>, %arg9: memref<64x128xbf16, #tpu.memory_space<vmem>>, %arg10: memref<1x128xf32, #tpu.memory_space<vmem>>, %arg11: memref<32x3200xbf16, #tpu.memory_space<vmem>>, %arg12: memref<1x3200xf32, #tpu.memory_space<vmem>>, %arg13: memref<2x3200xf32, #tpu.memory_space<vmem>>, %arg14: memref<2x32xf32, #tpu.memory_space<vmem>>, %arg15: memref<2x32xf32, #tpu.memory_space<vmem>>) attributes {dimension_semantics = [], scalar_prefetch = 0 : i64, scratch_operands = 0 : i64, tpu.core_type = #tpu.core_type<tc>} {
    %c0 = arith.constant 0 : index
    %c0_0 = arith.constant 0 : index
    %0 = vector.load %arg0[%c0, %c0_0] : memref<2x4096xbf16, #tpu.memory_space<vmem>>, vector<2x4096xbf16>
    %c0_1 = arith.constant 0 : index
    %c0_2 = arith.constant 0 : index
    %1 = vector.load %arg1[%c0_1, %c0_2] : memref<4096x32xbf16, #tpu.memory_space<vmem>>, vector<4096x32xbf16>
    %cst = arith.constant dense<0.000000e+00> : vector<2x32xf32>
    %2 = tpu.matmul %0, %1, %cst {dimension_numbers = #tpu.dot_dimension_numbers<[1], [0], [0], [1], [0, 0, 1, 1], [], []>} : vector<2x4096xbf16>, vector<4096x32xbf16>, vector<2x32xf32> -> vector<2x32xf32>
    %3 = arith.truncf %2 : vector<2x32xf32> to vector<2x32xbf16>
    %c0_3 = arith.constant 0 : index
    %c0_4 = arith.constant 0 : index
    %4 = vector.load %arg2[%c0_3, %c0_4] : memref<32x64xbf16, #tpu.memory_space<vmem>>, vector<32x64xbf16>
    %cst_5 = arith.constant dense<0.000000e+00> : vector<2x64xf32>
    %5 = tpu.matmul %3, %4, %cst_5 {dimension_numbers = #tpu.dot_dimension_numbers<[1], [0], [0], [1], [0, 0, 1, 1], [], []>} : vector<2x32xbf16>, vector<32x64xbf16>, vector<2x64xf32> -> vector<2x64xf32>
    %c0_6 = arith.constant 0 : index
    %c0_7 = arith.constant 0 : index
    %6 = vector.load %arg7[%c0_6, %c0_7] : memref<2x35xf32, #tpu.memory_space<vmem>>, vector<2x35xf32>
    %7 = arith.truncf %6 : vector<2x35xf32> to vector<2x35xbf16>
    %c0_8 = arith.constant 0 : index
    %c0_9 = arith.constant 0 : index
    %8 = vector.load %arg3[%c0_8, %c0_9] : memref<35x64xbf16, #tpu.memory_space<vmem>>, vector<35x64xbf16>
    %cst_10 = arith.constant dense<0.000000e+00> : vector<2x64xf32>
    %9 = tpu.matmul %7, %8, %cst_10 {dimension_numbers = #tpu.dot_dimension_numbers<[1], [0], [0], [1], [0, 0, 1, 1], [], []>} : vector<2x35xbf16>, vector<35x64xbf16>, vector<2x64xf32> -> vector<2x64xf32>
    %10 = arith.addf %5, %9 : vector<2x64xf32>
    %c0_11 = arith.constant 0 : index
    %c0_12 = arith.constant 0 : index
    %11 = vector.load %arg4[%c0_11, %c0_12] : memref<1x64xf32, #tpu.memory_space<vmem>>, vector<1x64xf32>
    %12 = vector.broadcast %11 : vector<1x64xf32> to vector<2x64xf32>
    %13 = arith.addf %10, %12 : vector<2x64xf32>
    %cst_13 = arith.constant 0.000000e+00 : f32
    %14 = vector.broadcast %cst_13 : f32 to vector<2x64xf32>
    %15 = arith.maximumf %13, %14 : vector<2x64xf32>
    %16 = arith.truncf %15 : vector<2x64xf32> to vector<2x64xbf16>
    %c0_14 = arith.constant 0 : index
    %c0_15 = arith.constant 0 : index
    %17 = vector.load %arg5[%c0_14, %c0_15] : memref<64x64xbf16, #tpu.memory_space<vmem>>, vector<64x64xbf16>
    %cst_16 = arith.constant dense<0.000000e+00> : vector<2x64xf32>
    %18 = tpu.matmul %16, %17, %cst_16 {dimension_numbers = #tpu.dot_dimension_numbers<[1], [0], [0], [1], [0, 0, 1, 1], [], []>} : vector<2x64xbf16>, vector<64x64xbf16>, vector<2x64xf32> -> vector<2x64xf32>
    %c0_17 = arith.constant 0 : index
    %c0_18 = arith.constant 0 : index
    %19 = vector.load %arg6[%c0_17, %c0_18] : memref<1x64xf32, #tpu.memory_space<vmem>>, vector<1x64xf32>
    %20 = vector.broadcast %19 : vector<1x64xf32> to vector<2x64xf32>
    %21 = arith.addf %18, %20 : vector<2x64xf32>
    %cst_19 = arith.constant 0.000000e+00 : f32
    %22 = vector.broadcast %cst_19 : f32 to vector<2x64xf32>
    %23 = arith.maximumf %21, %22 : vector<2x64xf32>
    %24 = arith.truncf %23 : vector<2x64xf32> to vector<2x64xbf16>
    %c0_20 = arith.constant 0 : index
    %c0_21 = arith.constant 0 : index
    %25 = vector.load %arg9[%c0_20, %c0_21] : memref<64x128xbf16, #tpu.memory_space<vmem>>, vector<64x128xbf16>
    %cst_22 = arith.constant dense<0.000000e+00> : vector<2x128xf32>
    %26 = tpu.matmul %24, %25, %cst_22 {dimension_numbers = #tpu.dot_dimension_numbers<[1], [0], [0], [1], [0, 0, 1, 1], [], []>} : vector<2x64xbf16>, vector<64x128xbf16>, vector<2x128xf32> -> vector<2x128xf32>
    %c0_23 = arith.constant 0 : index
    %c0_24 = arith.constant 0 : index
    %27 = vector.load %arg10[%c0_23, %c0_24] : memref<1x128xf32, #tpu.memory_space<vmem>>, vector<1x128xf32>
    %28 = vector.broadcast %27 : vector<1x128xf32> to vector<2x128xf32>
    %29 = arith.addf %26, %28 : vector<2x128xf32>
    %30 = arith.negf %29 : vector<2x128xf32>
    %31 = math.exp %30 : vector<2x128xf32>
    %cst_25 = arith.constant 1.000000e+00 : f32
    %32 = vector.broadcast %cst_25 : f32 to vector<2x128xf32>
    %33 = arith.addf %32, %31 : vector<2x128xf32>
    %34 = arith.divf %32, %33 : vector<2x128xf32>
    %35 = math.tanh %29 : vector<2x128xf32>
    %36 = vector.extract_strided_slice %34 {offsets = [0, 0], sizes = [2, 32], strides = [1, 1]} : vector<2x128xf32> to vector<2x32xf32>
    %37 = vector.extract_strided_slice %34 {offsets = [0, 32], sizes = [2, 32], strides = [1, 1]} : vector<2x128xf32> to vector<2x32xf32>
    %38 = vector.extract_strided_slice %35 {offsets = [0, 64], sizes = [2, 32], strides = [1, 1]} : vector<2x128xf32> to vector<2x32xf32>
    %39 = vector.extract_strided_slice %34 {offsets = [0, 96], sizes = [2, 32], strides = [1, 1]} : vector<2x128xf32> to vector<2x32xf32>
    %c0_26 = arith.constant 0 : index
    %c0_27 = arith.constant 0 : index
    %40 = vector.load %arg8[%c0_26, %c0_27] : memref<2x32xf32, #tpu.memory_space<vmem>>, vector<2x32xf32>
    %41 = arith.mulf %37, %40 : vector<2x32xf32>
    %42 = arith.mulf %36, %38 : vector<2x32xf32>
    %43 = arith.addf %41, %42 : vector<2x32xf32>
    %44 = math.tanh %43 : vector<2x32xf32>
    %45 = arith.mulf %39, %44 : vector<2x32xf32>
    %46 = arith.truncf %45 : vector<2x32xf32> to vector<2x32xbf16>
    %c0_28 = arith.constant 0 : index
    %c0_29 = arith.constant 0 : index
    %47 = vector.load %arg11[%c0_28, %c0_29] : memref<32x3200xbf16, #tpu.memory_space<vmem>>, vector<32x3200xbf16>
    %cst_30 = arith.constant dense<0.000000e+00> : vector<2x3200xf32>
    %48 = tpu.matmul %46, %47, %cst_30 {dimension_numbers = #tpu.dot_dimension_numbers<[1], [0], [0], [1], [0, 0, 1, 1], [], []>} : vector<2x32xbf16>, vector<32x3200xbf16>, vector<2x3200xf32> -> vector<2x3200xf32>
    %c0_31 = arith.constant 0 : index
    %c0_32 = arith.constant 0 : index
    %49 = vector.load %arg12[%c0_31, %c0_32] : memref<1x3200xf32, #tpu.memory_space<vmem>>, vector<1x3200xf32>
    %50 = vector.broadcast %49 : vector<1x3200xf32> to vector<2x3200xf32>
    %51 = arith.addf %48, %50 : vector<2x3200xf32>
    %cst_33 = arith.constant 0.000000e+00 : f32
    %52 = vector.broadcast %cst_33 : f32 to vector<2x3200xf32>
    %53 = arith.maximumf %51, %52 : vector<2x3200xf32>
    %c0_34 = arith.constant 0 : index
    %c0_35 = arith.constant 0 : index
    %54 = vector.load %arg13[%c0_34, %c0_35] : memref<2x3200xf32, #tpu.memory_space<vmem>>, vector<2x3200xf32>
    tpu.vector_store %arg13[%c0_34, %c0_35], %53 {strides = array<i32>} : memref<2x3200xf32, #tpu.memory_space<vmem>>, vector<2x3200xf32>,
    %c0_36 = arith.constant 0 : index
    %c0_37 = arith.constant 0 : index
    %55 = vector.load %arg14[%c0_36, %c0_37] : memref<2x32xf32, #tpu.memory_space<vmem>>, vector<2x32xf32>
    tpu.vector_store %arg14[%c0_36, %c0_37], %45 {strides = array<i32>} : memref<2x32xf32, #tpu.memory_space<vmem>>, vector<2x32xf32>,
    %c0_38 = arith.constant 0 : index
    %c0_39 = arith.constant 0 : index
    %56 = vector.load %arg15[%c0_38, %c0_39] : memref<2x32xf32, #tpu.memory_space<vmem>>, vector<2x32xf32>
    tpu.vector_store %arg15[%c0_38, %c0_39], %43 {strides = array<i32>} : memref<2x32xf32, #tpu.memory_space<vmem>>, vector<2x32xf32>,
    return
  }
}

</mosaic_0001>

<llo_original>
// kernel: resnet_depth_map_forward.1
$region0: #{resnet_depth_map_forward.1}
  #allocation0 [shape = 'u32[]', space=smem, size = 0x4, offset = 0x4, fixed_abs, tag = 'smem constant byte address 0x4 - core index']
  #allocation1 [shape = 'u32[72,128]{1,0:T(1,128)}', space=vmem, size = 0x9000, scoped, tag = 'internal scratch']
  %s0 = inlined_call_operand.vmem [shape: bf16[2,4096], index: 0, kind: input, shape index: {}]
  %s1 = inlined_call_operand.vmem [shape: bf16[4096,32], index: 1, kind: input, shape index: {}]
  %s2 = inlined_call_operand.vmem [shape: bf16[32,64], index: 2, kind: input, shape index: {}]
  %s3 = inlined_call_operand.vmem [shape: bf16[35,64], index: 3, kind: input, shape index: {}]
  %s4 = inlined_call_operand.vmem [shape: f32[1,64], index: 4, kind: input, shape index: {}]
  %s5 = inlined_call_operand.vmem [shape: bf16[64,64], index: 5, kind: input, shape index: {}]
  %s6 = inlined_call_operand.vmem [shape: f32[1,64], index: 6, kind: input, shape index: {}]
  %s7 = inlined_call_operand.vmem [shape: f32[2,35], index: 7, kind: input, shape index: {}]
  %s8 = inlined_call_operand.vmem [shape: f32[2,32], index: 8, kind: input, shape index: {}, may-alias: {8,15}]
  %s9 = inlined_call_operand.vmem [shape: bf16[64,128], index: 9, kind: input, shape index: {}]
  %s10 = inlined_call_operand.vmem [shape: f32[1,128], index: 10, kind: input, shape index: {}]
  %s11 = inlined_call_operand.vmem [shape: bf16[32,3200], index: 11, kind: input, shape index: {}]
  %s12 = inlined_call_operand.vmem [shape: f32[1,3200], index: 12, kind: input, shape index: {}]
  %s13 = inlined_call_operand.vmem [shape: f32[2,3200], index: 13, kind: output, shape index: {0}]
  %s14 = inlined_call_operand.hbm [shape: f32[2,32], index: 14, kind: output, shape index: {1}]
  %s15 = inlined_call_operand.vmem [shape: f32[2,32], index: 15, kind: output, shape index: {2}, may-alias: {8,15}]
  %16 = xla_tuple %s13, %s14, %s15
  %s17 = sld [smem:[#allocation0]]
  $region78: #{resnet_depth_map_forward.1} parent=0
    _
  %s19 = ssub.s32 1, %s17
  %s20 = scalar_select 0, %s19, %s17
  $region1: #{resnet_depth_map_forward.1} parent=0
    #allocation2 [shape = 'u8[1024]{0}', space=vmem, size = 0x400, scoped, tag = 'output window, operand 1, single buffered']
    #allocation3 [shape = 's32[1]{0}', space=sflag, size = 0x4, scoped, tag = 'scoped memory for resnet_depth_map_forward.1']
    %21 = vsyncpa [#allocation3], 0
    // Predicated region
    $region2: #{resnet_depth_map_forward.1} parent=1 // pred_check
      _
    $region3: #{resnet_depth_map_forward.1} parent=1 // pred_check_branch
      %23 = sbr.rel (0) target = $region5
    $region4: #{resnet_depth_map_forward.1} parent=1 // pred_region
      _
    $region5: #{resnet_depth_map_forward.1} parent=1 // pred_fallthru
      _
    // Predicated region
    $region6: #{resnet_depth_map_forward.1} parent=1 // pred_check
      _
    $region7: #{resnet_depth_map_forward.1} parent=1 // pred_check_branch
      %25 = sbr.rel (0) target = $region9
    $region8: #{resnet_depth_map_forward.1} parent=1 // pred_region
      _
    $region9: #{resnet_depth_map_forward.1} parent=1 // pred_fallthru
      _
    // Predicated region
    $region10: #{resnet_depth_map_forward.1} parent=1 // pred_check
      _
    $region11: #{resnet_depth_map_forward.1} parent=1 // pred_check_branch
      %27 = sbr.rel (0) target = $region13
    $region12: #{resnet_depth_map_forward.1} parent=1 // pred_region
      _
    $region13: #{resnet_depth_map_forward.1} parent=1 // pred_fallthru
      _
    // Predicated region
    $region14: #{resnet_depth_map_forward.1} parent=1 // pred_check
      _
    $region15: #{resnet_depth_map_forward.1} parent=1 // pred_check_branch
      %29 = sbr.rel (0) target = $region17
    $region16: #{resnet_depth_map_forward.1} parent=1 // pred_region
      _
    $region17: #{resnet_depth_map_forward.1} parent=1 // pred_fallthru
      _
    // Predicated region
    $region18: #{resnet_depth_map_forward.1} parent=1 // pred_check
      _
    $region19: #{resnet_depth_map_forward.1} parent=1 // pred_check_branch
      %31 = sbr.rel (0) target = $region21
    $region20: #{resnet_depth_map_forward.1} parent=1 // pred_region
      _
    $region21: #{resnet_depth_map_forward.1} parent=1 // pred_fallthru
      _
    // Predicated region
    $region22: #{resnet_depth_map_forward.1} parent=1 // pred_check
      _
    $region23: #{resnet_depth_map_forward.1} parent=1 // pred_check_branch
      %33 = sbr.rel (0) target = $region25
    $region24: #{resnet_depth_map_forward.1} parent=1 // pred_region
      _
    $region25: #{resnet_depth_map_forward.1} parent=1 // pred_fallthru
      _
    // Predicated region
    $region26: #{resnet_depth_map_forward.1} parent=1 // pred_check
      _
    $region27: #{resnet_depth_map_forward.1} parent=1 // pred_check_branch
      %35 = sbr.rel (0) target = $region29
    $region28: #{resnet_depth_map_forward.1} parent=1 // pred_region
      _
    $region29: #{resnet_depth_map_forward.1} parent=1 // pred_fallthru
      _
    // Predicated region
    $region30: #{resnet_depth_map_forward.1} parent=1 // pred_check
      _
    $region31: #{resnet_depth_map_forward.1} parent=1 // pred_check_branch
      %37 = sbr.rel (0) target = $region33
    $region32: #{resnet_depth_map_forward.1} parent=1 // pred_region
      _
    $region33: #{resnet_depth_map_forward.1} parent=1 // pred_fallthru
      _
    // Predicated region
    $region34: #{resnet_depth_map_forward.1} parent=1 // pred_check
      _
    $region35: #{resnet_depth_map_forward.1} parent=1 // pred_check_branch
      %39 = sbr.rel (0) target = $region37
    $region36: #{resnet_depth_map_forward.1} parent=1 // pred_region
      _
    $region37: #{resnet_depth_map_forward.1} parent=1 // pred_fallthru
      _
    // Predicated region
    $region38: #{resnet_depth_map_forward.1} parent=1 // pred_check
      _
    $region39: #{resnet_depth_map_forward.1} parent=1 // pred_check_branch
      %41 = sbr.rel (0) target = $region41
    $region40: #{resnet_depth_map_forward.1} parent=1 // pred_region
      _
    $region41: #{resnet_depth_map_forward.1} parent=1 // pred_fallthru
      _
    // Predicated region
    $region42: #{resnet_depth_map_forward.1} parent=1 // pred_check
      _
    $region43: #{resnet_depth_map_forward.1} parent=1 // pred_check_branch
      %43 = sbr.rel (0) target = $region45
    $region44: #{resnet_depth_map_forward.1} parent=1 // pred_region
      _
    $region45: #{resnet_depth_map_forward.1} parent=1 // pred_fallthru
      _
    // Predicated region
    $region46: #{resnet_depth_map_forward.1} parent=1 // pred_check
      _
    $region47: #{resnet_depth_map_forward.1} parent=1 // pred_check_branch
      %45 = sbr.rel (0) target = $region49
    $region48: #{resnet_depth_map_forward.1} parent=1 // pred_region
      _
    $region49: #{resnet_depth_map_forward.1} parent=1 // pred_fallthru
      _
    // Predicated region
    $region50: #{resnet_depth_map_forward.1} parent=1 // pred_check
      _
    $region51: #{resnet_depth_map_forward.1} parent=1 // pred_check_branch
      %47 = sbr.rel (0) target = $region53
    $region52: #{resnet_depth_map_forward.1} parent=1 // pred_region
      _
    $region53: #{resnet_depth_map_forward.1} parent=1 // pred_fallthru
      _
    %v49 = vld [vmem:[%s0] sm:$0xff]
    %v50 = vld [vmem:[%s0 + $0x8] sm:$0xff]
    %v51 = vld [vmem:[%s0 + $0x10] sm:$0xff]
    %v52 = vld [vmem:[%s0 + $0x18] sm:$0xff]
    %v53 = vld [vmem:[%s1] sm:$0xf]
    %v54 = vld [vmem:[%s1 + $0x4] sm:$0xf]
    %v55 = vld [vmem:[%s1 + $0x8] sm:$0xf]
    %v56 = vld [vmem:[%s1 + $0xc] sm:$0xf]
    %v57 = vld [vmem:[%s1 + $0x10] sm:$0xf]
    %v58 = vld [vmem:[%s1 + $0x14] sm:$0xf]
    %v59 = vld [vmem:[%s1 + $0x18] sm:$0xf]
    %v60 = vld [vmem:[%s1 + $0x1c] sm:$0xf]
    %v61 = vld [vmem:[%s1 + $0x20] sm:$0xf]
    %v62 = vld [vmem:[%s1 + $0x24] sm:$0xf]
    %v63 = vld [vmem:[%s1 + $0x28] sm:$0xf]
    %v64 = vld [vmem:[%s1 + $0x2c] sm:$0xf]
    %v65 = vld [vmem:[%s1 + $0x30] sm:$0xf]
    %v66 = vld [vmem:[%s1 + $0x34] sm:$0xf]
    %v67 = vld [vmem:[%s1 + $0x38] sm:$0xf]
    %v68 = vld [vmem:[%s1 + $0x3c] sm:$0xf]
    %v69 = vld [vmem:[%s1 + $0x40] sm:$0xf]
    %v70 = vld [vmem:[%s1 + $0x44] sm:$0xf]
    %v71 = vld [vmem:[%s1 + $0x48] sm:$0xf]
    %v72 = vld [vmem:[%s1 + $0x4c] sm:$0xf]
    %v73 = vld [vmem:[%s1 + $0x50] sm:$0xf]
    %v74 = vld [vmem:[%s1 + $0x54] sm:$0xf]
    %v75 = vld [vmem:[%s1 + $0x58] sm:$0xf]
    %v76 = vld [vmem:[%s1 + $0x5c] sm:$0xf]
    %v77 = vld [vmem:[%s1 + $0x60] sm:$0xf]
    %v78 = vld [vmem:[%s1 + $0x64] sm:$0xf]
    %v79 = vld [vmem:[%s1 + $0x68] sm:$0xf]
    %v80 = vld [vmem:[%s1 + $0x6c] sm:$0xf]
    %v81 = vld [vmem:[%s1 + $0x70] sm:$0xf]
    %v82 = vld [vmem:[%s1 + $0x74] sm:$0xf]
    %v83 = vld [vmem:[%s1 + $0x78] sm:$0xf]
    %v84 = vld [vmem:[%s1 + $0x7c] sm:$0xf]
    %v85 = vld [vmem:[%s1 + $0x80] sm:$0xf]
    %v86 = vld [vmem:[%s1 + $0x84] sm:$0xf]
    %v87 = vld [vmem:[%s1 + $0x88] sm:$0xf]
    %v88 = vld [vmem:[%s1 + $0x8c] sm:$0xf]
    %v89 = vld [vmem:[%s1 + $0x90] sm:$0xf]
    %v90 = vld [vmem:[%s1 + $0x94] sm:$0xf]
    %v91 = vld [vmem:[%s1 + $0x98] sm:$0xf]
    %v92 = vld [vmem:[%s1 + $0x9c] sm:$0xf]
    %v93 = vld [vmem:[%s1 + $0xa0] sm:$0xf]
    %v94 = vld [vmem:[%s1 + $0xa4] sm:$0xf]
    %v95 = vld [vmem:[%s1 + $0xa8] sm:$0xf]
    %v96 = vld [vmem:[%s1 + $0xac] sm:$0xf]
    %v97 = vld [vmem:[%s1 + $0xb0] sm:$0xf]
    %v98 = vld [vmem:[%s1 + $0xb4] sm:$0xf]
    %v99 = vld [vmem:[%s1 + $0xb8] sm:$0xf]
    %v100 = vld [vmem:[%s1 + $0xbc] sm:$0xf]
    %v101 = vld [vmem:[%s1 + $0xc0] sm:$0xf]
    %v102 = vld [vmem:[%s1 + $0xc4] sm:$0xf]
    %v103 = vld [vmem:[%s1 + $0xc8] sm:$0xf]
    %v104 = vld [vmem:[%s1 + $0xcc] sm:$0xf]
    %v105 = vld [vmem:[%s1 + $0xd0] sm:$0xf]
    %v106 = vld [vmem:[%s1 + $0xd4] sm:$0xf]
    %v107 = vld [vmem:[%s1 + $0xd8] sm:$0xf]
    %v108 = vld [vmem:[%s1 + $0xdc] sm:$0xf]
    %v109 = vld [vmem:[%s1 + $0xe0] sm:$0xf]
    %v110 = vld [vmem:[%s1 + $0xe4] sm:$0xf]
    %v111 = vld [vmem:[%s1 + $0xe8] sm:$0xf]
    %v112 = vld [vmem:[%s1 + $0xec] sm:$0xf]
    %v113 = vld [vmem:[%s1 + $0xf0] sm:$0xf]
    %v114 = vld [vmem:[%s1 + $0xf4] sm:$0xf]
    %v115 = vld [vmem:[%s1 + $0xf8] sm:$0xf]
    %v116 = vld [vmem:[%s1 + $0xfc] sm:$0xf]
    %v117 = vld [vmem:[%s1 + $0x100] sm:$0xf]
    %v118 = vld [vmem:[%s1 + $0x104] sm:$0xf]
    %v119 = vld [vmem:[%s1 + $0x108] sm:$0xf]
    %v120 = vld [vmem:[%s1 + $0x10c] sm:$0xf]
    %v121 = vld [vmem:[%s1 + $0x110] sm:$0xf]
    %v122 = vld [vmem:[%s1 + $0x114] sm:$0xf]
    %v123 = vld [vmem:[%s1 + $0x118] sm:$0xf]
    %v124 = vld [vmem:[%s1 + $0x11c] sm:$0xf]
    %v125 = vld [vmem:[%s1 + $0x120] sm:$0xf]
    %v126 = vld [vmem:[%s1 + $0x124] sm:$0xf]
    %v127 = vld [vmem:[%s1 + $0x128] sm:$0xf]
    %v128 = vld [vmem:[%s1 + $0x12c] sm:$0xf]
    %v129 = vld [vmem:[%s1 + $0x130] sm:$0xf]
    %v130 = vld [vmem:[%s1 + $0x134] sm:$0xf]
    %v131 = vld [vmem:[%s1 + $0x138] sm:$0xf]
    %v132 = vld [vmem:[%s1 + $0x13c] sm:$0xf]
    %v133 = vld [vmem:[%s1 + $0x140] sm:$0xf]
    %v134 = vld [vmem:[%s1 + $0x144] sm:$0xf]
    %v135 = vld [vmem:[%s1 + $0x148] sm:$0xf]
    %v136 = vld [vmem:[%s1 + $0x14c] sm:$0xf]
    %v137 = vld [vmem:[%s1 + $0x150] sm:$0xf]
    %v138 = vld [vmem:[%s1 + $0x154] sm:$0xf]
    %v139 = vld [vmem:[%s1 + $0x158] sm:$0xf]
    %v140 = vld [vmem:[%s1 + $0x15c] sm:$0xf]
    %v141 = vld [vmem:[%s1 + $0x160] sm:$0xf]
    %v142 = vld [vmem:[%s1 + $0x164] sm:$0xf]
    %v143 = vld [vmem:[%s1 + $0x168] sm:$0xf]
    %v144 = vld [vmem:[%s1 + $0x16c] sm:$0xf]
    %v145 = vld [vmem:[%s1 + $0x170] sm:$0xf]
    %v146 = vld [vmem:[%s1 + $0x174] sm:$0xf]
    %v147 = vld [vmem:[%s1 + $0x178] sm:$0xf]
    %v148 = vld [vmem:[%s1 + $0x17c] sm:$0xf]
    %v149 = vld [vmem:[%s1 + $0x180] sm:$0xf]
    %v150 = vld [vmem:[%s1 + $0x184] sm:$0xf]
    %v151 = vld [vmem:[%s1 + $0x188] sm:$0xf]
    %v152 = vld [vmem:[%s1 + $0x18c] sm:$0xf]
    %v153 = vld [vmem:[%s1 + $0x190] sm:$0xf]
    %v154 = vld [vmem:[%s1 + $0x194] sm:$0xf]
    %v155 = vld [vmem:[%s1 + $0x198] sm:$0xf]
    %v156 = vld [vmem:[%s1 + $0x19c] sm:$0xf]
    %v157 = vld [vmem:[%s1 + $0x1a0] sm:$0xf]
    %v158 = vld [vmem:[%s1 + $0x1a4] sm:$0xf]
    %v159 = vld [vmem:[%s1 + $0x1a8] sm:$0xf]
    %v160 = vld [vmem:[%s1 + $0x1ac] sm:$0xf]
    %v161 = vld [vmem:[%s1 + $0x1b0] sm:$0xf]
    %v162 = vld [vmem:[%s1 + $0x1b4] sm:$0xf]
    %v163 = vld [vmem:[%s1 + $0x1b8] sm:$0xf]
    %v164 = vld [vmem:[%s1 + $0x1bc] sm:$0xf]
    %v165 = vld [vmem:[%s1 + $0x1c0] sm:$0xf]
    %v166 = vld [vmem:[%s1 + $0x1c4] sm:$0xf]
    %v167 = vld [vmem:[%s1 + $0x1c8] sm:$0xf]
    %v168 = vld [vmem:[%s1 + $0x1cc] sm:$0xf]
    %v169 = vld [vmem:[%s1 + $0x1d0] sm:$0xf]
    %v170 = vld [vmem:[%s1 + $0x1d4] sm:$0xf]
    %v171 = vld [vmem:[%s1 + $0x1d8] sm:$0xf]
    %v172 = vld [vmem:[%s1 + $0x1dc] sm:$0xf]
    %v173 = vld [vmem:[%s1 + $0x1e0] sm:$0xf]
    %v174 = vld [vmem:[%s1 + $0x1e4] sm:$0xf]
    %v175 = vld [vmem:[%s1 + $0x1e8] sm:$0xf]
    %v176 = vld [vmem:[%s1 + $0x1ec] sm:$0xf]
    %v177 = vld [vmem:[%s1 + $0x1f0] sm:$0xf]
    %v178 = vld [vmem:[%s1 + $0x1f4] sm:$0xf]
    %v179 = vld [vmem:[%s1 + $0x1f8] sm:$0xf]
    %v180 = vld [vmem:[%s1 + $0x1fc] sm:$0xf]
    %v181 = vld [vmem:[%s1 + $0x200] sm:$0xf]
    %v182 = vld [vmem:[%s1 + $0x204] sm:$0xf]
    %v183 = vld [vmem:[%s1 + $0x208] sm:$0xf]
    %v184 = vld [vmem:[%s1 + $0x20c] sm:$0xf]
    %v185 = vld [vmem:[%s1 + $0x210] sm:$0xf]
    %v186 = vld [vmem:[%s1 + $0x214] sm:$0xf]
    %v187 = vld [vmem:[%s1 + $0x218] sm:$0xf]
    %v188 = vld [vmem:[%s1 + $0x21c] sm:$0xf]
    %v189 = vld [vmem:[%s1 + $0x220] sm:$0xf]
    %v190 = vld [vmem:[%s1 + $0x224] sm:$0xf]
    %v191 = vld [vmem:[%s1 + $0x228] sm:$0xf]
    %v192 = vld [vmem:[%s1 + $0x22c] sm:$0xf]
    %v193 = vld [vmem:[%s1 + $0x230] sm:$0xf]
    %v194 = vld [vmem:[%s1 + $0x234] sm:$0xf]
    %v195 = vld [vmem:[%s1 + $0x238] sm:$0xf]
    %v196 = vld [vmem:[%s1 + $0x23c] sm:$0xf]
    %v197 = vld [vmem:[%s1 + $0x240] sm:$0xf]
    %v198 = vld [vmem:[%s1 + $0x244] sm:$0xf]
    %v199 = vld [vmem:[%s1 + $0x248] sm:$0xf]
    %v200 = vld [vmem:[%s1 + $0x24c] sm:$0xf]
    %v201 = vld [vmem:[%s1 + $0x250] sm:$0xf]
    %v202 = vld [vmem:[%s1 + $0x254] sm:$0xf]
    %v203 = vld [vmem:[%s1 + $0x258] sm:$0xf]
    %v204 = vld [vmem:[%s1 + $0x25c] sm:$0xf]
    %v205 = vld [vmem:[%s1 + $0x260] sm:$0xf]
    %v206 = vld [vmem:[%s1 + $0x264] sm:$0xf]
    %v207 = vld [vmem:[%s1 + $0x268] sm:$0xf]
    %v208 = vld [vmem:[%s1 + $0x26c] sm:$0xf]
    %v209 = vld [vmem:[%s1 + $0x270] sm:$0xf]
    %v210 = vld [vmem:[%s1 + $0x274] sm:$0xf]
    %v211 = vld [vmem:[%s1 + $0x278] sm:$0xf]
    %v212 = vld [vmem:[%s1 + $0x27c] sm:$0xf]
    %v213 = vld [vmem:[%s1 + $0x280] sm:$0xf]
    %v214 = vld [vmem:[%s1 + $0x284] sm:$0xf]
    %v215 = vld [vmem:[%s1 + $0x288] sm:$0xf]
    %v216 = vld [vmem:[%s1 + $0x28c] sm:$0xf]
    %v217 = vld [vmem:[%s1 + $0x290] sm:$0xf]
    %v218 = vld [vmem:[%s1 + $0x294] sm:$0xf]
    %v219 = vld [vmem:[%s1 + $0x298] sm:$0xf]
    %v220 = vld [vmem:[%s1 + $0x29c] sm:$0xf]
    %v221 = vld [vmem:[%s1 + $0x2a0] sm:$0xf]
    %v222 = vld [vmem:[%s1 + $0x2a4] sm:$0xf]
    %v223 = vld [vmem:[%s1 + $0x2a8] sm:$0xf]
    %v224 = vld [vmem:[%s1 + $0x2ac] sm:$0xf]
    %v225 = vld [vmem:[%s1 + $0x2b0] sm:$0xf]
    %v226 = vld [vmem:[%s1 + $0x2b4] sm:$0xf]
    %v227 = vld [vmem:[%s1 + $0x2b8] sm:$0xf]
    %v228 = vld [vmem:[%s1 + $0x2bc] sm:$0xf]
    %v229 = vld [vmem:[%s1 + $0x2c0] sm:$0xf]
    %v230 = vld [vmem:[%s1 + $0x2c4] sm:$0xf]
    %v231 = vld [vmem:[%s1 + $0x2c8] sm:$0xf]
    %v232 = vld [vmem:[%s1 + $0x2cc] sm:$0xf]
    %v233 = vld [vmem:[%s1 + $0x2d0] sm:$0xf]
    %v234 = vld [vmem:[%s1 + $0x2d4] sm:$0xf]
    %v235 = vld [vmem:[%s1 + $0x2d8] sm:$0xf]
    %v236 = vld [vmem:[%s1 + $0x2dc] sm:$0xf]
    %v237 = vld [vmem:[%s1 + $0x2e0] sm:$0xf]
    %v238 = vld [vmem:[%s1 + $0x2e4] sm:$0xf]
    %v239 = vld [vmem:[%s1 + $0x2e8] sm:$0xf]
    %v240 = vld [vmem:[%s1 + $0x2ec] sm:$0xf]
    %v241 = vld [vmem:[%s1 + $0x2f0] sm:$0xf]
    %v242 = vld [vmem:[%s1 + $0x2f4] sm:$0xf]
    %v243 = vld [vmem:[%s1 + $0x2f8] sm:$0xf]
    %v244 = vld [vmem:[%s1 + $0x2fc] sm:$0xf]
    %v245 = vld [vmem:[%s1 + $0x300] sm:$0xf]
    %v246 = vld [vmem:[%s1 + $0x304] sm:$0xf]
    %v247 = vld [vmem:[%s1 + $0x308] sm:$0xf]
    %v248 = vld [vmem:[%s1 + $0x30c] sm:$0xf]
    %v249 = vld [vmem:[%s1 + $0x310] sm:$0xf]
    %v250 = vld [vmem:[%s1 + $0x314] sm:$0xf]
    %v251 = vld [vmem:[%s1 + $0x318] sm:$0xf]
    %v252 = vld [vmem:[%s1 + $0x31c] sm:$0xf]
    %v253 = vld [vmem:[%s1 + $0x320] sm:$0xf]
    %v254 = vld [vmem:[%s1 + $0x324] sm:$0xf]
    %v255 = vld [vmem:[%s1 + $0x328] sm:$0xf]
    %v256 = vld [vmem:[%s1 + $0x32c] sm:$0xf]
    %v257 = vld [vmem:[%s1 + $0x330] sm:$0xf]
    %v258 = vld [vmem:[%s1 + $0x334] sm:$0xf]
    %v259 = vld [vmem:[%s1 + $0x338] sm:$0xf]
    %v260 = vld [vmem:[%s1 + $0x33c] sm:$0xf]
    %v261 = vld [vmem:[%s1 + $0x340] sm:$0xf]
    %v262 = vld [vmem:[%s1 + $0x344] sm:$0xf]
    %v263 = vld [vmem:[%s1 + $0x348] sm:$0xf]
    %v264 = vld [vmem:[%s1 + $0x34c] sm:$0xf]
    %v265 = vld [vmem:[%s1 + $0x350] sm:$0xf]
    %v266 = vld [vmem:[%s1 + $0x354] sm:$0xf]
    %v267 = vld [vmem:[%s1 + $0x358] sm:$0xf]
    %v268 = vld [vmem:[%s1 + $0x35c] sm:$0xf]
    %v269 = vld [vmem:[%s1 + $0x360] sm:$0xf]
    %v270 = vld [vmem:[%s1 + $0x364] sm:$0xf]
    %v271 = vld [vmem:[%s1 + $0x368] sm:$0xf]
    %v272 = vld [vmem:[%s1 + $0x36c] sm:$0xf]
    %v273 = vld [vmem:[%s1 + $0x370] sm:$0xf]
    %v274 = vld [vmem:[%s1 + $0x374] sm:$0xf]
    %v275 = vld [vmem:[%s1 + $0x378] sm:$0xf]
    %v276 = vld [vmem:[%s1 + $0x37c] sm:$0xf]
    %v277 = vld [vmem:[%s1 + $0x380] sm:$0xf]
    %v278 = vld [vmem:[%s1 + $0x384] sm:$0xf]
    %v279 = vld [vmem:[%s1 + $0x388] sm:$0xf]
    %v280 = vld [vmem:[%s1 + $0x38c] sm:$0xf]
    %v281 = vld [vmem:[%s1 + $0x390] sm:$0xf]
    %v282 = vld [vmem:[%s1 + $0x394] sm:$0xf]
    %v283 = vld [vmem:[%s1 + $0x398] sm:$0xf]
    %v284 = vld [vmem:[%s1 + $0x39c] sm:$0xf]
    %v285 = vld [vmem:[%s1 + $0x3a0] sm:$0xf]
    %v286 = vld [vmem:[%s1 + $0x3a4] sm:$0xf]
    %v287 = vld [vmem:[%s1 + $0x3a8] sm:$0xf]
    %v288 = vld [vmem:[%s1 + $0x3ac] sm:$0xf]
    %v289 = vld [vmem:[%s1 + $0x3b0] sm:$0xf]
    %v290 = vld [vmem:[%s1 + $0x3b4] sm:$0xf]
    %v291 = vld [vmem:[%s1 + $0x3b8] sm:$0xf]
    %v292 = vld [vmem:[%s1 + $0x3bc] sm:$0xf]
    %v293 = vld [vmem:[%s1 + $0x3c0] sm:$0xf]
    %v294 = vld [vmem:[%s1 + $0x3c4] sm:$0xf]
    %v295 = vld [vmem:[%s1 + $0x3c8] sm:$0xf]
    %v296 = vld [vmem:[%s1 + $0x3cc] sm:$0xf]
    %v297 = vld [vmem:[%s1 + $0x3d0] sm:$0xf]
    %v298 = vld [vmem:[%s1 + $0x3d4] sm:$0xf]
    %v299 = vld [vmem:[%s1 + $0x3d8] sm:$0xf]
    %v300 = vld [vmem:[%s1 + $0x3dc] sm:$0xf]
    %v301 = vld [vmem:[%s1 + $0x3e0] sm:$0xf]
    %v302 = vld [vmem:[%s1 + $0x3e4] sm:$0xf]
    %v303 = vld [vmem:[%s1 + $0x3e8] sm:$0xf]
    %v304 = vld [vmem:[%s1 + $0x3ec] sm:$0xf]
    %v305 = vld [vmem:[%s1 + $0x3f0] sm:$0xf]
    %v306 = vld [vmem:[%s1 + $0x3f4] sm:$0xf]
    %v307 = vld [vmem:[%s1 + $0x3f8] sm:$0xf]
    %v308 = vld [vmem:[%s1 + $0x3fc] sm:$0xf]
    %v309 = vld [vmem:[%s1 + $0x400] sm:$0xf]
    %v310 = vld [vmem:[%s1 + $0x404] sm:$0xf]
    %v311 = vld [vmem:[%s1 + $0x408] sm:$0xf]
    %v312 = vld [vmem:[%s1 + $0x40c] sm:$0xf]
    %v313 = vld [vmem:[%s1 + $0x410] sm:$0xf]
    %v314 = vld [vmem:[%s1 + $0x414] sm:$0xf]
    %v315 = vld [vmem:[%s1 + $0x418] sm:$0xf]
    %v316 = vld [vmem:[%s1 + $0x41c] sm:$0xf]
    %v317 = vld [vmem:[%s1 + $0x420] sm:$0xf]
    %v318 = vld [vmem:[%s1 + $0x424] sm:$0xf]
    %v319 = vld [vmem:[%s1 + $0x428] sm:$0xf]
    %v320 = vld [vmem:[%s1 + $0x42c] sm:$0xf]
    %v321 = vld [vmem:[%s1 + $0x430] sm:$0xf]
    %v322 = vld [vmem:[%s1 + $0x434] sm:$0xf]
    %v323 = vld [vmem:[%s1 + $0x438] sm:$0xf]
    %v324 = vld [vmem:[%s1 + $0x43c] sm:$0xf]
    %v325 = vld [vmem:[%s1 + $0x440] sm:$0xf]
    %v326 = vld [vmem:[%s1 + $0x444] sm:$0xf]
    %v327 = vld [vmem:[%s1 + $0x448] sm:$0xf]
    %v328 = vld [vmem:[%s1 + $0x44c] sm:$0xf]
    %v329 = vld [vmem:[%s1 + $0x450] sm:$0xf]
    %v330 = vld [vmem:[%s1 + $0x454] sm:$0xf]
    %v331 = vld [vmem:[%s1 + $0x458] sm:$0xf]
    %v332 = vld [vmem:[%s1 + $0x45c] sm:$0xf]
    %v333 = vld [vmem:[%s1 + $0x460] sm:$0xf]
    %v334 = vld [vmem:[%s1 + $0x464] sm:$0xf]
    %v335 = vld [vmem:[%s1 + $0x468] sm:$0xf]
    %v336 = vld [vmem:[%s1 + $0x46c] sm:$0xf]
    %v337 = vld [vmem:[%s1 + $0x470] sm:$0xf]
    %v338 = vld [vmem:[%s1 + $0x474] sm:$0xf]
    %v339 = vld [vmem:[%s1 + $0x478] sm:$0xf]
    %v340 = vld [vmem:[%s1 + $0x47c] sm:$0xf]
    %v341 = vld [vmem:[%s1 + $0x480] sm:$0xf]
    %v342 = vld [vmem:[%s1 + $0x484] sm:$0xf]
    %v343 = vld [vmem:[%s1 + $0x488] sm:$0xf]
    %v344 = vld [vmem:[%s1 + $0x48c] sm:$0xf]
    %v345 = vld [vmem:[%s1 + $0x490] sm:$0xf]
    %v346 = vld [vmem:[%s1 + $0x494] sm:$0xf]
    %v347 = vld [vmem:[%s1 + $0x498] sm:$0xf]
    %v348 = vld [vmem:[%s1 + $0x49c] sm:$0xf]
    %v349 = vld [vmem:[%s1 + $0x4a0] sm:$0xf]
    %v350 = vld [vmem:[%s1 + $0x4a4] sm:$0xf]
    %v351 = vld [vmem:[%s1 + $0x4a8] sm:$0xf]
    %v352 = vld [vmem:[%s1 + $0x4ac] sm:$0xf]
    %v353 = vld [vmem:[%s1 + $0x4b0] sm:$0xf]
    %v354 = vld [vmem:[%s1 + $0x4b4] sm:$0xf]
    %v355 = vld [vmem:[%s1 + $0x4b8] sm:$0xf]
    %v356 = vld [vmem:[%s1 + $0x4bc] sm:$0xf]
    %v357 = vld [vmem:[%s1 + $0x4c0] sm:$0xf]
    %v358 = vld [vmem:[%s1 + $0x4c4] sm:$0xf]
    %v359 = vld [vmem:[%s1 + $0x4c8] sm:$0xf]
    %v360 = vld [vmem:[%s1 + $0x4cc] sm:$0xf]
    %v361 = vld [vmem:[%s1 + $0x4d0] sm:$0xf]
    %v362 = vld [vmem:[%s1 + $0x4d4] sm:$0xf]
    %v363 = vld [vmem:[%s1 + $0x4d8] sm:$0xf]
    %v364 = vld [vmem:[%s1 + $0x4dc] sm:$0xf]
    %v365 = vld [vmem:[%s1 + $0x4e0] sm:$0xf]
    %v366 = vld [vmem:[%s1 + $0x4e4] sm:$0xf]
    %v367 = vld [vmem:[%s1 + $0x4e8] sm:$0xf]
    %v368 = vld [vmem:[%s1 + $0x4ec] sm:$0xf]
    %v369 = vld [vmem:[%s1 + $0x4f0] sm:$0xf]
    %v370 = vld [vmem:[%s1 + $0x4f4] sm:$0xf]
    %v371 = vld [vmem:[%s1 + $0x4f8] sm:$0xf]
    %v372 = vld [vmem:[%s1 + $0x4fc] sm:$0xf]
    %v373 = vld [vmem:[%s1 + $0x500] sm:$0xf]
    %v374 = vld [vmem:[%s1 + $0x504] sm:$0xf]
    %v375 = vld [vmem:[%s1 + $0x508] sm:$0xf]
    %v376 = vld [vmem:[%s1 + $0x50c] sm:$0xf]
    %v377 = vld [vmem:[%s1 + $0x510] sm:$0xf]
    %v378 = vld [vmem:[%s1 + $0x514] sm:$0xf]
    %v379 = vld [vmem:[%s1 + $0x518] sm:$0xf]
    %v380 = vld [vmem:[%s1 + $0x51c] sm:$0xf]
    %v381 = vld [vmem:[%s1 + $0x520] sm:$0xf]
    %v382 = vld [vmem:[%s1 + $0x524] sm:$0xf]
    %v383 = vld [vmem:[%s1 + $0x528] sm:$0xf]
    %v384 = vld [vmem:[%s1 + $0x52c] sm:$0xf]
    %v385 = vld [vmem:[%s1 + $0x530] sm:$0xf]
    %v386 = vld [vmem:[%s1 + $0x534] sm:$0xf]
    %v387 = vld [vmem:[%s1 + $0x538] sm:$0xf]
    %v388 = vld [vmem:[%s1 + $0x53c] sm:$0xf]
    %v389 = vld [vmem:[%s1 + $0x540] sm:$0xf]
    %v390 = vld [vmem:[%s1 + $0x544] sm:$0xf]
    %v391 = vld [vmem:[%s1 + $0x548] sm:$0xf]
    %v392 = vld [vmem:[%s1 + $0x54c] sm:$0xf]
    %v393 = vld [vmem:[%s1 + $0x550] sm:$0xf]
    %v394 = vld [vmem:[%s1 + $0x554] sm:$0xf]
    %v395 = vld [vmem:[%s1 + $0x558] sm:$0xf]
    %v396 = vld [vmem:[%s1 + $0x55c] sm:$0xf]
    %v397 = vld [vmem:[%s1 + $0x560] sm:$0xf]
    %v398 = vld [vmem:[%s1 + $0x564] sm:$0xf]
    %v399 = vld [vmem:[%s1 + $0x568] sm:$0xf]
    %v400 = vld [vmem:[%s1 + $0x56c] sm:$0xf]
    %v401 = vld [vmem:[%s1 + $0x570] sm:$0xf]
    %v402 = vld [vmem:[%s1 + $0x574] sm:$0xf]
    %v403 = vld [vmem:[%s1 + $0x578] sm:$0xf]
    %v404 = vld [vmem:[%s1 + $0x57c] sm:$0xf]
    %v405 = vld [vmem:[%s1 + $0x580] sm:$0xf]
    %v406 = vld [vmem:[%s1 + $0x584] sm:$0xf]
    %v407 = vld [vmem:[%s1 + $0x588] sm:$0xf]
    %v408 = vld [vmem:[%s1 + $0x58c] sm:$0xf]
    %v409 = vld [vmem:[%s1 + $0x590] sm:$0xf]
    %v410 = vld [vmem:[%s1 + $0x594] sm:$0xf]
    %v411 = vld [vmem:[%s1 + $0x598] sm:$0xf]
    %v412 = vld [vmem:[%s1 + $0x59c] sm:$0xf]
    %v413 = vld [vmem:[%s1 + $0x5a0] sm:$0xf]
    %v414 = vld [vmem:[%s1 + $0x5a4] sm:$0xf]
    %v415 = vld [vmem:[%s1 + $0x5a8] sm:$0xf]
    %v416 = vld [vmem:[%s1 + $0x5ac] sm:$0xf]
    %v417 = vld [vmem:[%s1 + $0x5b0] sm:$0xf]
    %v418 = vld [vmem:[%s1 + $0x5b4] sm:$0xf]
    %v419 = vld [vmem:[%s1 + $0x5b8] sm:$0xf]
    %v420 = vld [vmem:[%s1 + $0x5bc] sm:$0xf]
    %v421 = vld [vmem:[%s1 + $0x5c0] sm:$0xf]
    %v422 = vld [vmem:[%s1 + $0x5c4] sm:$0xf]
    %v423 = vld [vmem:[%s1 + $0x5c8] sm:$0xf]
    %v424 = vld [vmem:[%s1 + $0x5cc] sm:$0xf]
    %v425 = vld [vmem:[%s1 + $0x5d0] sm:$0xf]
    %v426 = vld [vmem:[%s1 + $0x5d4] sm:$0xf]
    %v427 = vld [vmem:[%s1 + $0x5d8] sm:$0xf]
    %v428 = vld [vmem:[%s1 + $0x5dc] sm:$0xf]
    %v429 = vld [vmem:[%s1 + $0x5e0] sm:$0xf]
    %v430 = vld [vmem:[%s1 + $0x5e4] sm:$0xf]
    %v431 = vld [vmem:[%s1 + $0x5e8] sm:$0xf]
    %v432 = vld [vmem:[%s1 + $0x5ec] sm:$0xf]
    %v433 = vld [vmem:[%s1 + $0x5f0] sm:$0xf]
    %v434 = vld [vmem:[%s1 + $0x5f4] sm:$0xf]
    %v435 = vld [vmem:[%s1 + $0x5f8] sm:$0xf]
    %v436 = vld [vmem:[%s1 + $0x5fc] sm:$0xf]
    %v437 = vld [vmem:[%s1 + $0x600] sm:$0xf]
    %v438 = vld [vmem:[%s1 + $0x604] sm:$0xf]
    %v439 = vld [vmem:[%s1 + $0x608] sm:$0xf]
    %v440 = vld [vmem:[%s1 + $0x60c] sm:$0xf]
    %v441 = vld [vmem:[%s1 + $0x610] sm:$0xf]
    %v442 = vld [vmem:[%s1 + $0x614] sm:$0xf]
    %v443 = vld [vmem:[%s1 + $0x618] sm:$0xf]
    %v444 = vld [vmem:[%s1 + $0x61c] sm:$0xf]
    %v445 = vld [vmem:[%s1 + $0x620] sm:$0xf]
    %v446 = vld [vmem:[%s1 + $0x624] sm:$0xf]
    %v447 = vld [vmem:[%s1 + $0x628] sm:$0xf]
    %v448 = vld [vmem:[%s1 + $0x62c] sm:$0xf]
    %v449 = vld [vmem:[%s1 + $0x630] sm:$0xf]
    %v450 = vld [vmem:[%s1 + $0x634] sm:$0xf]
    %v451 = vld [vmem:[%s1 + $0x638] sm:$0xf]
    %v452 = vld [vmem:[%s1 + $0x63c] sm:$0xf]
    %v453 = vld [vmem:[%s1 + $0x640] sm:$0xf]
    %v454 = vld [vmem:[%s1 + $0x644] sm:$0xf]
    %v455 = vld [vmem:[%s1 + $0x648] sm:$0xf]
    %v456 = vld [vmem:[%s1 + $0x64c] sm:$0xf]
    %v457 = vld [vmem:[%s1 + $0x650] sm:$0xf]
    %v458 = vld [vmem:[%s1 + $0x654] sm:$0xf]
    %v459 = vld [vmem:[%s1 + $0x658] sm:$0xf]
    %v460 = vld [vmem:[%s1 + $0x65c] sm:$0xf]
    %v461 = vld [vmem:[%s1 + $0x660] sm:$0xf]
    %v462 = vld [vmem:[%s1 + $0x664] sm:$0xf]
    %v463 = vld [vmem:[%s1 + $0x668] sm:$0xf]
    %v464 = vld [vmem:[%s1 + $0x66c] sm:$0xf]
    %v465 = vld [vmem:[%s1 + $0x670] sm:$0xf]
    %v466 = vld [vmem:[%s1 + $0x674] sm:$0xf]
    %v467 = vld [vmem:[%s1 + $0x678] sm:$0xf]
    %v468 = vld [vmem:[%s1 + $0x67c] sm:$0xf]
    %v469 = vld [vmem:[%s1 + $0x680] sm:$0xf]
    %v470 = vld [vmem:[%s1 + $0x684] sm:$0xf]
    %v471 = vld [vmem:[%s1 + $0x688] sm:$0xf]
    %v472 = vld [vmem:[%s1 + $0x68c] sm:$0xf]
    %v473 = vld [vmem:[%s1 + $0x690] sm:$0xf]
    %v474 = vld [vmem:[%s1 + $0x694] sm:$0xf]
    %v475 = vld [vmem:[%s1 + $0x698] sm:$0xf]
    %v476 = vld [vmem:[%s1 + $0x69c] sm:$0xf]
    %v477 = vld [vmem:[%s1 + $0x6a0] sm:$0xf]
    %v478 = vld [vmem:[%s1 + $0x6a4] sm:$0xf]
    %v479 = vld [vmem:[%s1 + $0x6a8] sm:$0xf]
    %v480 = vld [vmem:[%s1 + $0x6ac] sm:$0xf]
    %v481 = vld [vmem:[%s1 + $0x6b0] sm:$0xf]
    %v482 = vld [vmem:[%s1 + $0x6b4] sm:$0xf]
    %v483 = vld [vmem:[%s1 + $0x6b8] sm:$0xf]
    %v484 = vld [vmem:[%s1 + $0x6bc] sm:$0xf]
    %v485 = vld [vmem:[%s1 + $0x6c0] sm:$0xf]
    %v486 = vld [vmem:[%s1 + $0x6c4] sm:$0xf]
    %v487 = vld [vmem:[%s1 + $0x6c8] sm:$0xf]
    %v488 = vld [vmem:[%s1 + $0x6cc] sm:$0xf]
    %v489 = vld [vmem:[%s1 + $0x6d0] sm:$0xf]
    %v490 = vld [vmem:[%s1 + $0x6d4] sm:$0xf]
    %v491 = vld [vmem:[%s1 + $0x6d8] sm:$0xf]
    %v492 = vld [vmem:[%s1 + $0x6dc] sm:$0xf]
    %v493 = vld [vmem:[%s1 + $0x6e0] sm:$0xf]
    %v494 = vld [vmem:[%s1 + $0x6e4] sm:$0xf]
    %v495 = vld [vmem:[%s1 + $0x6e8] sm:$0xf]
    %v496 = vld [vmem:[%s1 + $0x6ec] sm:$0xf]
    %v497 = vld [vmem:[%s1 + $0x6f0] sm:$0xf]
    %v498 = vld [vmem:[%s1 + $0x6f4] sm:$0xf]
    %v499 = vld [vmem:[%s1 + $0x6f8] sm:$0xf]
    %v500 = vld [vmem:[%s1 + $0x6fc] sm:$0xf]
    %v501 = vld [vmem:[%s1 + $0x700] sm:$0xf]
    %v502 = vld [vmem:[%s1 + $0x704] sm:$0xf]
    %v503 = vld [vmem:[%s1 + $0x708] sm:$0xf]
    %v504 = vld [vmem:[%s1 + $0x70c] sm:$0xf]
    %v505 = vld [vmem:[%s1 + $0x710] sm:$0xf]
    %v506 = vld [vmem:[%s1 + $0x714] sm:$0xf]
    %v507 = vld [vmem:[%s1 + $0x718] sm:$0xf]
    %v508 = vld [vmem:[%s1 + $0x71c] sm:$0xf]
    %v509 = vld [vmem:[%s1 + $0x720] sm:$0xf]
    %v510 = vld [vmem:[%s1 + $0x724] sm:$0xf]
    %v511 = vld [vmem:[%s1 + $0x728] sm:$0xf]
    %v512 = vld [vmem:[%s1 + $0x72c] sm:$0xf]
    %v513 = vld [vmem:[%s1 + $0x730] sm:$0xf]
    %v514 = vld [vmem:[%s1 + $0x734] sm:$0xf]
    %v515 = vld [vmem:[%s1 + $0x738] sm:$0xf]
    %v516 = vld [vmem:[%s1 + $0x73c] sm:$0xf]
    %v517 = vld [vmem:[%s1 + $0x740] sm:$0xf]
    %v518 = vld [vmem:[%s1 + $0x744] sm:$0xf]
    %v519 = vld [vmem:[%s1 + $0x748] sm:$0xf]
    %v520 = vld [vmem:[%s1 + $0x74c] sm:$0xf]
    %v521 = vld [vmem:[%s1 + $0x750] sm:$0xf]
    %v522 = vld [vmem:[%s1 + $0x754] sm:$0xf]
    %v523 = vld [vmem:[%s1 + $0x758] sm:$0xf]
    %v524 = vld [vmem:[%s1 + $0x75c] sm:$0xf]
    %v525 = vld [vmem:[%s1 + $0x760] sm:$0xf]
    %v526 = vld [vmem:[%s1 + $0x764] sm:$0xf]
    %v527 = vld [vmem:[%s1 + $0x768] sm:$0xf]
    %v528 = vld [vmem:[%s1 + $0x76c] sm:$0xf]
    %v529 = vld [vmem:[%s1 + $0x770] sm:$0xf]
    %v530 = vld [vmem:[%s1 + $0x774] sm:$0xf]
    %v531 = vld [vmem:[%s1 + $0x778] sm:$0xf]
    %v532 = vld [vmem:[%s1 + $0x77c] sm:$0xf]
    %v533 = vld [vmem:[%s1 + $0x780] sm:$0xf]
    %v534 = vld [vmem:[%s1 + $0x784] sm:$0xf]
    %v535 = vld [vmem:[%s1 + $0x788] sm:$0xf]
    %v536 = vld [vmem:[%s1 + $0x78c] sm:$0xf]
    %v537 = vld [vmem:[%s1 + $0x790] sm:$0xf]
    %v538 = vld [vmem:[%s1 + $0x794] sm:$0xf]
    %v539 = vld [vmem:[%s1 + $0x798] sm:$0xf]
    %v540 = vld [vmem:[%s1 + $0x79c] sm:$0xf]
    %v541 = vld [vmem:[%s1 + $0x7a0] sm:$0xf]
    %v542 = vld [vmem:[%s1 + $0x7a4] sm:$0xf]
    %v543 = vld [vmem:[%s1 + $0x7a8] sm:$0xf]
    %v544 = vld [vmem:[%s1 + $0x7ac] sm:$0xf]
    %v545 = vld [vmem:[%s1 + $0x7b0] sm:$0xf]
    %v546 = vld [vmem:[%s1 + $0x7b4] sm:$0xf]
    %v547 = vld [vmem:[%s1 + $0x7b8] sm:$0xf]
    %v548 = vld [vmem:[%s1 + $0x7bc] sm:$0xf]
    %v549 = vld [vmem:[%s1 + $0x7c0] sm:$0xf]
    %v550 = vld [vmem:[%s1 + $0x7c4] sm:$0xf]
    %v551 = vld [vmem:[%s1 + $0x7c8] sm:$0xf]
    %v552 = vld [vmem:[%s1 + $0x7cc] sm:$0xf]
    %v553 = vld [vmem:[%s1 + $0x7d0] sm:$0xf]
    %v554 = vld [vmem:[%s1 + $0x7d4] sm:$0xf]
    %v555 = vld [vmem:[%s1 + $0x7d8] sm:$0xf]
    %v556 = vld [vmem:[%s1 + $0x7dc] sm:$0xf]
    %v557 = vld [vmem:[%s1 + $0x7e0] sm:$0xf]
    %v558 = vld [vmem:[%s1 + $0x7e4] sm:$0xf]
    %v559 = vld [vmem:[%s1 + $0x7e8] sm:$0xf]
    %v560 = vld [vmem:[%s1 + $0x7ec] sm:$0xf]
    %v561 = vld [vmem:[%s1 + $0x7f0] sm:$0xf]
    %v562 = vld [vmem:[%s1 + $0x7f4] sm:$0xf]
    %v563 = vld [vmem:[%s1 + $0x7f8] sm:$0xf]
    %v564 = vld [vmem:[%s1 + $0x7fc] sm:$0xf]
    %566 = vst [vmem:[#allocation1] ss:$9 sm:$0xff] %v49
    %v567 = vld [vmem:[#allocation1] sm:$0xff]
    %v568 = vld [vmem:[#allocation1 + $0x9] sm:$0xff]
    %v569 = vld [vmem:[#allocation1 + $0x12] sm:$0xff]
    %v570 = vld [vmem:[#allocation1 + $0x1b] sm:$0xff]
    %v571 = vld [vmem:[#allocation1 + $0x24] sm:$0xff]
    %v572 = vld [vmem:[#allocation1 + $0x2d] sm:$0xff]
    %v573 = vld [vmem:[#allocation1 + $0x36] sm:$0xff]
    %v574 = vld [vmem:[#allocation1 + $0x3f] sm:$0xff]
    %576 = vst [vmem:[#allocation1] ss:$9 sm:$0xff] %v50
    %v577 = vld [vmem:[#allocation1] sm:$0xff]
    %v578 = vld [vmem:[#allocation1 + $0x9] sm:$0xff]
    %v579 = vld [vmem:[#allocation1 + $0x12] sm:$0xff]
    %v580 = vld [vmem:[#allocation1 + $0x1b] sm:$0xff]
    %v581 = vld [vmem:[#allocation1 + $0x24] sm:$0xff]
    %v582 = vld [vmem:[#allocation1 + $0x2d] sm:$0xff]
    %v583 = vld [vmem:[#allocation1 + $0x36] sm:$0xff]
    %v584 = vld [vmem:[#allocation1 + $0x3f] sm:$0xff]
    %586 = vst [vmem:[#allocation1] ss:$9 sm:$0xff] %v51
    %v587 = vld [vmem:[#allocation1] sm:$0xff]
    %v588 = vld [vmem:[#allocation1 + $0x9] sm:$0xff]
    %v589 = vld [vmem:[#allocation1 + $0x12] sm:$0xff]
    %v590 = vld [vmem:[#allocation1 + $0x1b] sm:$0xff]
    %v591 = vld [vmem:[#allocation1 + $0x24] sm:$0xff]
    %v592 = vld [vmem:[#allocation1 + $0x2d] sm:$0xff]
    %v593 = vld [vmem:[#allocation1 + $0x36] sm:$0xff]
    %v594 = vld [vmem:[#allocation1 + $0x3f] sm:$0xff]
    %596 = vst [vmem:[#allocation1] ss:$9 sm:$0xff] %v52
    %v597 = vld [vmem:[#allocation1] sm:$0xff]
    %v598 = vld [vmem:[#allocation1 + $0x9] sm:$0xff]
    %v599 = vld [vmem:[#allocation1 + $0x12] sm:$0xff]
    %v600 = vld [vmem:[#allocation1 + $0x1b] sm:$0xff]
    %v601 = vld [vmem:[#allocation1 + $0x24] sm:$0xff]
    %v602 = vld [vmem:[#allocation1 + $0x2d] sm:$0xff]
    %v603 = vld [vmem:[#allocation1 + $0x36] sm:$0xff]
    %v604 = vld [vmem:[#allocation1 + $0x3f] sm:$0xff]
    %v1149 = vunpack.c.l.b16 %v53
    %v1150 = vunpack.c.l.b16 %v54
    %v1151 = vunpack.c.l.b16 %v55
    %v1152 = vunpack.c.l.b16 %v56
    %v1153 = vunpack.c.l.b16 %v57
    %v1154 = vunpack.c.l.b16 %v58
    %v1155 = vunpack.c.l.b16 %v59
    %v1156 = vunpack.c.l.b16 %v60
    %v1157 = vunpack.c.l.b16 %v61
    %v1158 = vunpack.c.l.b16 %v62
    %v1159 = vunpack.c.l.b16 %v63
    %v1160 = vunpack.c.l.b16 %v64
    %v1161 = vunpack.c.l.b16 %v65
    %v1162 = vunpack.c.l.b16 %v66
    %v1163 = vunpack.c.l.b16 %v67
    %v1164 = vunpack.c.l.b16 %v68
    %v1165 = vunpack.c.l.b16 %v69
    %v1166 = vunpack.c.l.b16 %v70
    %v1167 = vunpack.c.l.b16 %v71
    %v1168 = vunpack.c.l.b16 %v72
    %v1169 = vunpack.c.l.b16 %v73
    %v1170 = vunpack.c.l.b16 %v74
    %v1171 = vunpack.c.l.b16 %v75
    %v1172 = vunpack.c.l.b16 %v76
    %v1173 = vunpack.c.l.b16 %v77
    %v1174 = vunpack.c.l.b16 %v78
    %v1175 = vunpack.c.l.b16 %v79
    %v1176 = vunpack.c.l.b16 %v80
    %v1177 = vunpack.c.l.b16 %v81
    %v1178 = vunpack.c.l.b16 %v82
    %v1179 = vunpack.c.l.b16 %v83
    %v1180 = vunpack.c.l.b16 %v84
    %v1181 = vunpack.c.l.b16 %v85
    %v1182 = vunpack.c.l.b16 %v86
    %v1183 = vunpack.c.l.b16 %v87
    %v1184 = vunpack.c.l.b16 %v88
    %v1185 = vunpack.c.l.b16 %v89
    %v1186 = vunpack.c.l.b16 %v90
    %v1187 = vunpack.c.l.b16 %v91
    %v1188 = vunpack.c.l.b16 %v92
    %v1189 = vunpack.c.l.b16 %v93
    %v1190 = vunpack.c.l.b16 %v94
    %v1191 = vunpack.c.l.b16 %v95
    %v1192 = vunpack.c.l.b16 %v96
    %v1193 = vunpack.c.l.b16 %v97
    %v1194 = vunpack.c.l.b16 %v98
    %v1195 = vunpack.c.l.b16 %v99
    %v1196 = vunpack.c.l.b16 %v100
    %v1197 = vunpack.c.l.b16 %v101
    %v1198 = vunpack.c.l.b16 %v102
    %v1199 = vunpack.c.l.b16 %v103
    %v1200 = vunpack.c.l.b16 %v104
    %v1201 = vunpack.c.l.b16 %v105
    %v1202 = vunpack.c.l.b16 %v106
    %v1203 = vunpack.c.l.b16 %v107
    %v1204 = vunpack.c.l.b16 %v108
    %v1205 = vunpack.c.l.b16 %v109
    %v1206 = vunpack.c.l.b16 %v110
    %v1207 = vunpack.c.l.b16 %v111
    %v1208 = vunpack.c.l.b16 %v112
    %v1209 = vunpack.c.l.b16 %v113
    %v1210 = vunpack.c.l.b16 %v114
    %v1211 = vunpack.c.l.b16 %v115
    %v1212 = vunpack.c.l.b16 %v116
    %v1213 = vunpack.c.l.b16 %v117
    %v1214 = vunpack.c.l.b16 %v118
    %v1215 = vunpack.c.l.b16 %v119
    %v1216 = vunpack.c.l.b16 %v120
    %v1217 = vunpack.c.l.b16 %v121
    %v1218 = vunpack.c.l.b16 %v122
    %v1219 = vunpack.c.l.b16 %v123
    %v1220 = vunpack.c.l.b16 %v124
    %v1221 = vunpack.c.l.b16 %v125
    %v1222 = vunpack.c.l.b16 %v126
    %v1223 = vunpack.c.l.b16 %v127
    %v1224 = vunpack.c.l.b16 %v128
    %v1225 = vunpack.c.l.b16 %v129
    %v1226 = vunpack.c.l.b16 %v130
    %v1227 = vunpack.c.l.b16 %v131
    %v1228 = vunpack.c.l.b16 %v132
    %v1229 = vunpack.c.l.b16 %v133
    %v1230 = vunpack.c.l.b16 %v134
    %v1231 = vunpack.c.l.b16 %v135
    %v1232 = vunpack.c.l.b16 %v136
    %v1233 = vunpack.c.l.b16 %v137
    %v1234 = vunpack.c.l.b16 %v138
    %v1235 = vunpack.c.l.b16 %v139
    %v1236 = vunpack.c.l.b16 %v140
    %v1237 = vunpack.c.l.b16 %v141
    %v1238 = vunpack.c.l.b16 %v142
    %v1239 = vunpack.c.l.b16 %v143
    %v1240 = vunpack.c.l.b16 %v144
    %v1241 = vunpack.c.l.b16 %v145
    %v1242 = vunpack.c.l.b16 %v146
    %v1243 = vunpack.c.l.b16 %v147
    %v1244 = vunpack.c.l.b16 %v148
    %v1245 = vunpack.c.l.b16 %v149
    %v1246 = vunpack.c.l.b16 %v150
    %v1247 = vunpack.c.l.b16 %v151
    %v1248 = vunpack.c.l.b16 %v152
    %v1249 = vunpack.c.l.b16 %v153
    %v1250 = vunpack.c.l.b16 %v154
    %v1251 = vunpack.c.l.b16 %v155
    %v1252 = vunpack.c.l.b16 %v156
    %v1253 = vunpack.c.l.b16 %v157
    %v1254 = vunpack.c.l.b16 %v158
    %v1255 = vunpack.c.l.b16 %v159
    %v1256 = vunpack.c.l.b16 %v160
    %v1257 = vunpack.c.l.b16 %v161
    %v1258 = vunpack.c.l.b16 %v162
    %v1259 = vunpack.c.l.b16 %v163
    %v1260 = vunpack.c.l.b16 %v164
    %v1261 = vunpack.c.l.b16 %v165
    %v1262 = vunpack.c.l.b16 %v166
    %v1263 = vunpack.c.l.b16 %v167
    %v1264 = vunpack.c.l.b16 %v168
    %v1265 = vunpack.c.l.b16 %v169
    %v1266 = vunpack.c.l.b16 %v170
    %v1267 = vunpack.c.l.b16 %v171
    %v1268 = vunpack.c.l.b16 %v172
    %v1269 = vunpack.c.l.b16 %v173
    %v1270 = vunpack.c.l.b16 %v174
    %v1271 = vunpack.c.l.b16 %v175
    %v1272 = vunpack.c.l.b16 %v176
    %v1273 = vunpack.c.l.b16 %v177
    %v1274 = vunpack.c.l.b16 %v178
    %v1275 = vunpack.c.l.b16 %v179
    %v1276 = vunpack.c.l.b16 %v180
    %v1277 = vunpack.c.l.b16 %v181
    %v1278 = vunpack.c.l.b16 %v182
    %v1279 = vunpack.c.l.b16 %v183
    %v1280 = vunpack.c.l.b16 %v184
    %v1281 = vunpack.c.l.b16 %v185
    %v1282 = vunpack.c.l.b16 %v186
    %v1283 = vunpack.c.l.b16 %v187
    %v1284 = vunpack.c.l.b16 %v188
    %v1285 = vunpack.c.l.b16 %v189
    %v1286 = vunpack.c.l.b16 %v190
    %v1287 = vunpack.c.l.b16 %v191
    %v1288 = vunpack.c.l.b16 %v192
    %v1289 = vunpack.c.l.b16 %v193
    %v1290 = vunpack.c.l.b16 %v194
    %v1291 = vunpack.c.l.b16 %v195
    %v1292 = vunpack.c.l.b16 %v196
    %v1293 = vunpack.c.l.b16 %v197
    %v1294 = vunpack.c.l.b16 %v198
    %v1295 = vunpack.c.l.b16 %v199
    %v1296 = vunpack.c.l.b16 %v200
    %v1297 = vunpack.c.l.b16 %v201
    %v1298 = vunpack.c.l.b16 %v202
    %v1299 = vunpack.c.l.b16 %v203
    %v1300 = vunpack.c.l.b16 %v204
    %v1301 = vunpack.c.l.b16 %v205
    %v1302 = vunpack.c.l.b16 %v206
    %v1303 = vunpack.c.l.b16 %v207
    %v1304 = vunpack.c.l.b16 %v208
    %v1305 = vunpack.c.l.b16 %v209
    %v1306 = vunpack.c.l.b16 %v210
    %v1307 = vunpack.c.l.b16 %v211
    %v1308 = vunpack.c.l.b16 %v212
    %v1309 = vunpack.c.l.b16 %v213
    %v1310 = vunpack.c.l.b16 %v214
    %v1311 = vunpack.c.l.b16 %v215
    %v1312 = vunpack.c.l.b16 %v216
    %v1313 = vunpack.c.l.b16 %v217
    %v1314 = vunpack.c.l.b16 %v218
    %v1315 = vunpack.c.l.b16 %v219
    %v1316 = vunpack.c.l.b16 %v220
    %v1317 = vunpack.c.l.b16 %v221
    %v1318 = vunpack.c.l.b16 %v222
    %v1319 = vunpack.c.l.b16 %v223
    %v1320 = vunpack.c.l.b16 %v224
    %v1321 = vunpack.c.l.b16 %v225
    %v1322 = vunpack.c.l.b16 %v226
    %v1323 = vunpack.c.l.b16 %v227
    %v1324 = vunpack.c.l.b16 %v228
    %v1325 = vunpack.c.l.b16 %v229
    %v1326 = vunpack.c.l.b16 %v230
    %v1327 = vunpack.c.l.b16 %v231
    %v1328 = vunpack.c.l.b16 %v232
    %v1329 = vunpack.c.l.b16 %v233
    %v1330 = vunpack.c.l.b16 %v234
    %v1331 = vunpack.c.l.b16 %v235
    %v1332 = vunpack.c.l.b16 %v236
    %v1333 = vunpack.c.l.b16 %v237
    %v1334 = vunpack.c.l.b16 %v238
    %v1335 = vunpack.c.l.b16 %v239
    %v1336 = vunpack.c.l.b16 %v240
    %v1337 = vunpack.c.l.b16 %v241
    %v1338 = vunpack.c.l.b16 %v242
    %v1339 = vunpack.c.l.b16 %v243
    %v1340 = vunpack.c.l.b16 %v244
    %v1341 = vunpack.c.l.b16 %v245
    %v1342 = vunpack.c.l.b16 %v246
    %v1343 = vunpack.c.l.b16 %v247
    %v1344 = vunpack.c.l.b16 %v248
    %v1345 = vunpack.c.l.b16 %v249
    %v1346 = vunpack.c.l.b16 %v250
    %v1347 = vunpack.c.l.b16 %v251
    %v1348 = vunpack.c.l.b16 %v252
    %v1349 = vunpack.c.l.b16 %v253
    %v1350 = vunpack.c.l.b16 %v254
    %v1351 = vunpack.c.l.b16 %v255
    %v1352 = vunpack.c.l.b16 %v256
    %v1353 = vunpack.c.l.b16 %v257
    %v1354 = vunpack.c.l.b16 %v258
    %v1355 = vunpack.c.l.b16 %v259
    %v1356 = vunpack.c.l.b16 %v260
    %v1357 = vunpack.c.l.b16 %v261
    %v1358 = vunpack.c.l.b16 %v262
    %v1359 = vunpack.c.l.b16 %v263
    %v1360 = vunpack.c.l.b16 %v264
    %v1361 = vunpack.c.l.b16 %v265
    %v1362 = vunpack.c.l.b16 %v266
    %v1363 = vunpack.c.l.b16 %v267
    %v1364 = vunpack.c.l.b16 %v268
    %v1365 = vunpack.c.l.b16 %v269
    %v1366 = vunpack.c.l.b16 %v270
    %v1367 = vunpack.c.l.b16 %v271
    %v1368 = vunpack.c.l.b16 %v272
    %v1369 = vunpack.c.l.b16 %v273
    %v1370 = vunpack.c.l.b16 %v274
    %v1371 = vunpack.c.l.b16 %v275
    %v1372 = vunpack.c.l.b16 %v276
    %v1373 = vunpack.c.l.b16 %v277
    %v1374 = vunpack.c.l.b16 %v278
    %v1375 = vunpack.c.l.b16 %v279
    %v1376 = vunpack.c.l.b16 %v280
    %v1377 = vunpack.c.l.b16 %v281
    %v1378 = vunpack.c.l.b16 %v282
    %v1379 = vunpack.c.l.b16 %v283
    %v1380 = vunpack.c.l.b16 %v284
    %v1381 = vunpack.c.l.b16 %v285
    %v1382 = vunpack.c.l.b16 %v286
    %v1383 = vunpack.c.l.b16 %v287
    %v1384 = vunpack.c.l.b16 %v288
    %v1385 = vunpack.c.l.b16 %v289
    %v1386 = vunpack.c.l.b16 %v290
    %v1387 = vunpack.c.l.b16 %v291
    %v1388 = vunpack.c.l.b16 %v292
    %v1389 = vunpack.c.l.b16 %v293
    %v1390 = vunpack.c.l.b16 %v294
    %v1391 = vunpack.c.l.b16 %v295
    %v1392 = vunpack.c.l.b16 %v296
    %v1393 = vunpack.c.l.b16 %v297
    %v1394 = vunpack.c.l.b16 %v298
    %v1395 = vunpack.c.l.b16 %v299
    %v1396 = vunpack.c.l.b16 %v300
    %v1397 = vunpack.c.l.b16 %v301
    %v1398 = vunpack.c.l.b16 %v302
    %v1399 = vunpack.c.l.b16 %v303
    %v1400 = vunpack.c.l.b16 %v304
    %v1401 = vunpack.c.l.b16 %v305
    %v1402 = vunpack.c.l.b16 %v306
    %v1403 = vunpack.c.l.b16 %v307
    %v1404 = vunpack.c.l.b16 %v308
    %v1405 = vunpack.c.l.b16 %v309
    %v1406 = vunpack.c.l.b16 %v310
    %v1407 = vunpack.c.l.b16 %v311
    %v1408 = vunpack.c.l.b16 %v312
    %v1409 = vunpack.c.l.b16 %v313
    %v1410 = vunpack.c.l.b16 %v314
    %v1411 = vunpack.c.l.b16 %v315
    %v1412 = vunpack.c.l.b16 %v316
    %v1413 = vunpack.c.l.b16 %v317
    %v1414 = vunpack.c.l.b16 %v318
    %v1415 = vunpack.c.l.b16 %v319
    %v1416 = vunpack.c.l.b16 %v320
    %v1417 = vunpack.c.l.b16 %v321
    %v1418 = vunpack.c.l.b16 %v322
    %v1419 = vunpack.c.l.b16 %v323
    %v1420 = vunpack.c.l.b16 %v324
    %v1421 = vunpack.c.l.b16 %v325
    %v1422 = vunpack.c.l.b16 %v326
    %v1423 = vunpack.c.l.b16 %v327
    %v1424 = vunpack.c.l.b16 %v328
    %v1425 = vunpack.c.l.b16 %v329
    %v1426 = vunpack.c.l.b16 %v330
    %v1427 = vunpack.c.l.b16 %v331
    %v1428 = vunpack.c.l.b16 %v332
    %v1429 = vunpack.c.l.b16 %v333
    %v1430 = vunpack.c.l.b16 %v334
    %v1431 = vunpack.c.l.b16 %v335
    %v1432 = vunpack.c.l.b16 %v336
    %v1433 = vunpack.c.l.b16 %v337
    %v1434 = vunpack.c.l.b16 %v338
    %v1435 = vunpack.c.l.b16 %v339
    %v1436 = vunpack.c.l.b16 %v340
    %v1437 = vunpack.c.l.b16 %v341
    %v1438 = vunpack.c.l.b16 %v342
    %v1439 = vunpack.c.l.b16 %v343
    %v1440 = vunpack.c.l.b16 %v344
    %v1441 = vunpack.c.l.b16 %v345
    %v1442 = vunpack.c.l.b16 %v346
    %v1443 = vunpack.c.l.b16 %v347
    %v1444 = vunpack.c.l.b16 %v348
    %v1445 = vunpack.c.l.b16 %v349
    %v1446 = vunpack.c.l.b16 %v350
    %v1447 = vunpack.c.l.b16 %v351
    %v1448 = vunpack.c.l.b16 %v352
    %v1449 = vunpack.c.l.b16 %v353
    %v1450 = vunpack.c.l.b16 %v354
    %v1451 = vunpack.c.l.b16 %v355
    %v1452 = vunpack.c.l.b16 %v356
    %v1453 = vunpack.c.l.b16 %v357
    %v1454 = vunpack.c.l.b16 %v358
    %v1455 = vunpack.c.l.b16 %v359
    %v1456 = vunpack.c.l.b16 %v360
    %v1457 = vunpack.c.l.b16 %v361
    %v1458 = vunpack.c.l.b16 %v362
    %v1459 = vunpack.c.l.b16 %v363
    %v1460 = vunpack.c.l.b16 %v364
    %v1461 = vunpack.c.l.b16 %v365
    %v1462 = vunpack.c.l.b16 %v366
    %v1463 = vunpack.c.l.b16 %v367
    %v1464 = vunpack.c.l.b16 %v368
    %v1465 = vunpack.c.l.b16 %v369
    %v1466 = vunpack.c.l.b16 %v370
    %v1467 = vunpack.c.l.b16 %v371
    %v1468 = vunpack.c.l.b16 %v372
    %v1469 = vunpack.c.l.b16 %v373
    %v1470 = vunpack.c.l.b16 %v374
    %v1471 = vunpack.c.l.b16 %v375
    %v1472 = vunpack.c.l.b16 %v376
    %v1473 = vunpack.c.l.b16 %v377
    %v1474 = vunpack.c.l.b16 %v378
    %v1475 = vunpack.c.l.b16 %v379
    %v1476 = vunpack.c.l.b16 %v380
    %v1477 = vunpack.c.l.b16 %v381
    %v1478 = vunpack.c.l.b16 %v382
    %v1479 = vunpack.c.l.b16 %v383
    %v1480 = vunpack.c.l.b16 %v384
    %v1481 = vunpack.c.l.b16 %v385
    %v1482 = vunpack.c.l.b16 %v386
    %v1483 = vunpack.c.l.b16 %v387
    %v1484 = vunpack.c.l.b16 %v388
    %v1485 = vunpack.c.l.b16 %v389
    %v1486 = vunpack.c.l.b16 %v390
    %v1487 = vunpack.c.l.b16 %v391
    %v1488 = vunpack.c.l.b16 %v392
    %v1489 = vunpack.c.l.b16 %v393
    %v1490 = vunpack.c.l.b16 %v394
    %v1491 = vunpack.c.l.b16 %v395
    %v1492 = vunpack.c.l.b16 %v396
    %v1493 = vunpack.c.l.b16 %v397
    %v1494 = vunpack.c.l.b16 %v398
    %v1495 = vunpack.c.l.b16 %v399
    %v1496 = vunpack.c.l.b16 %v400
    %v1497 = vunpack.c.l.b16 %v401
    %v1498 = vunpack.c.l.b16 %v402
    %v1499 = vunpack.c.l.b16 %v403
    %v1500 = vunpack.c.l.b16 %v404
    %v1501 = vunpack.c.l.b16 %v405
    %v1502 = vunpack.c.l.b16 %v406
    %v1503 = vunpack.c.l.b16 %v407
    %v1504 = vunpack.c.l.b16 %v408
    %v1505 = vunpack.c.l.b16 %v409
    %v1506 = vunpack.c.l.b16 %v410
    %v1507 = vunpack.c.l.b16 %v411
    %v1508 = vunpack.c.l.b16 %v412
    %v1509 = vunpack.c.l.b16 %v413
    %v1510 = vunpack.c.l.b16 %v414
    %v1511 = vunpack.c.l.b16 %v415
    %v1512 = vunpack.c.l.b16 %v416
    %v1513 = vunpack.c.l.b16 %v417
    %v1514 = vunpack.c.l.b16 %v418
    %v1515 = vunpack.c.l.b16 %v419
    %v1516 = vunpack.c.l.b16 %v420
    %v1517 = vunpack.c.l.b16 %v421
    %v1518 = vunpack.c.l.b16 %v422
    %v1519 = vunpack.c.l.b16 %v423
    %v1520 = vunpack.c.l.b16 %v424
    %v1521 = vunpack.c.l.b16 %v425
    %v1522 = vunpack.c.l.b16 %v426
    %v1523 = vunpack.c.l.b16 %v427
    %v1524 = vunpack.c.l.b16 %v428
    %v1525 = vunpack.c.l.b16 %v429
    %v1526 = vunpack.c.l.b16 %v430
    %v1527 = vunpack.c.l.b16 %v431
    %v1528 = vunpack.c.l.b16 %v432
    %v1529 = vunpack.c.l.b16 %v433
    %v1530 = vunpack.c.l.b16 %v434
    %v1531 = vunpack.c.l.b16 %v435
    %v1532 = vunpack.c.l.b16 %v436
    %v1533 = vunpack.c.l.b16 %v437
    %v1534 = vunpack.c.l.b16 %v438
    %v1535 = vunpack.c.l.b16 %v439
    %v1536 = vunpack.c.l.b16 %v440
    %v1537 = vunpack.c.l.b16 %v441
    %v1538 = vunpack.c.l.b16 %v442
    %v1539 = vunpack.c.l.b16 %v443
    %v1540 = vunpack.c.l.b16 %v444
    %v1541 = vunpack.c.l.b16 %v445
    %v1542 = vunpack.c.l.b16 %v446
    %v1543 = vunpack.c.l.b16 %v447
    %v1544 = vunpack.c.l.b16 %v448
    %v1545 = vunpack.c.l.b16 %v449
    %v1546 = vunpack.c.l.b16 %v450
    %v1547 = vunpack.c.l.b16 %v451
    %v1548 = vunpack.c.l.b16 %v452
    %v1549 = vunpack.c.l.b16 %v453
    %v1550 = vunpack.c.l.b16 %v454
    %v1551 = vunpack.c.l.b16 %v455
    %v1552 = vunpack.c.l.b16 %v456
    %v1553 = vunpack.c.l.b16 %v457
    %v1554 = vunpack.c.l.b16 %v458
    %v1555 = vunpack.c.l.b16 %v459
    %v1556 = vunpack.c.l.b16 %v460
    %v1557 = vunpack.c.l.b16 %v461
    %v1558 = vunpack.c.l.b16 %v462
    %v1559 = vunpack.c.l.b16 %v463
    %v1560 = vunpack.c.l.b16 %v464
    %v1561 = vunpack.c.l.b16 %v465
    %v1562 = vunpack.c.l.b16 %v466
    %v1563 = vunpack.c.l.b16 %v467
    %v1564 = vunpack.c.l.b16 %v468
    %v1565 = vunpack.c.l.b16 %v469
    %v1566 = vunpack.c.l.b16 %v470
    %v1567 = vunpack.c.l.b16 %v471
    %v1568 = vunpack.c.l.b16 %v472
    %v1569 = vunpack.c.l.b16 %v473
    %v1570 = vunpack.c.l.b16 %v474
    %v1571 = vunpack.c.l.b16 %v475
    %v1572 = vunpack.c.l.b16 %v476
    %v1573 = vunpack.c.l.b16 %v477
    %v1574 = vunpack.c.l.b16 %v478
    %v1575 = vunpack.c.l.b16 %v479
    %v1576 = vunpack.c.l.b16 %v480
    %v1577 = vunpack.c.l.b16 %v481
    %v1578 = vunpack.c.l.b16 %v482
    %v1579 = vunpack.c.l.b16 %v483
    %v1580 = vunpack.c.l.b16 %v484
    %v1581 = vunpack.c.l.b16 %v485
    %v1582 = vunpack.c.l.b16 %v486
    %v1583 = vunpack.c.l.b16 %v487
    %v1584 = vunpack.c.l.b16 %v488
    %v1585 = vunpack.c.l.b16 %v489
    %v1586 = vunpack.c.l.b16 %v490
    %v1587 = vunpack.c.l.b16 %v491
    %v1588 = vunpack.c.l.b16 %v492
    %v1589 = vunpack.c.l.b16 %v493
    %v1590 = vunpack.c.l.b16 %v494
    %v1591 = vunpack.c.l.b16 %v495
    %v1592 = vunpack.c.l.b16 %v496
    %v1593 = vunpack.c.l.b16 %v497
    %v1594 = vunpack.c.l.b16 %v498
    %v1595 = vunpack.c.l.b16 %v499
    %v1596 = vunpack.c.l.b16 %v500
    %v1597 = vunpack.c.l.b16 %v501
    %v1598 = vunpack.c.l.b16 %v502
    %v1599 = vunpack.c.l.b16 %v503
    %v1600 = vunpack.c.l.b16 %v504
    %v1601 = vunpack.c.l.b16 %v505
    %v1602 = vunpack.c.l.b16 %v506
    %v1603 = vunpack.c.l.b16 %v507
    %v1604 = vunpack.c.l.b16 %v508
    %v1605 = vunpack.c.l.b16 %v509
    %v1606 = vunpack.c.l.b16 %v510
    %v1607 = vunpack.c.l.b16 %v511
    %v1608 = vunpack.c.l.b16 %v512
    %v1609 = vunpack.c.l.b16 %v513
    %v1610 = vunpack.c.l.b16 %v514
    %v1611 = vunpack.c.l.b16 %v515
    %v1612 = vunpack.c.l.b16 %v516
    %v1613 = vunpack.c.l.b16 %v517
    %v1614 = vunpack.c.l.b16 %v518
    %v1615 = vunpack.c.l.b16 %v519
    %v1616 = vunpack.c.l.b16 %v520
    %v1617 = vunpack.c.l.b16 %v521
    %v1618 = vunpack.c.l.b16 %v522
    %v1619 = vunpack.c.l.b16 %v523
    %v1620 = vunpack.c.l.b16 %v524
    %v1621 = vunpack.c.l.b16 %v525
    %v1622 = vunpack.c.l.b16 %v526
    %v1623 = vunpack.c.l.b16 %v527
    %v1624 = vunpack.c.l.b16 %v528
    %v1625 = vunpack.c.l.b16 %v529
    %v1626 = vunpack.c.l.b16 %v530
    %v1627 = vunpack.c.l.b16 %v531
    %v1628 = vunpack.c.l.b16 %v532
    %v1629 = vunpack.c.l.b16 %v533
    %v1630 = vunpack.c.l.b16 %v534
    %v1631 = vunpack.c.l.b16 %v535
    %v1632 = vunpack.c.l.b16 %v536
    %v1633 = vunpack.c.l.b16 %v537
    %v1634 = vunpack.c.l.b16 %v538
    %v1635 = vunpack.c.l.b16 %v539
    %v1636 = vunpack.c.l.b16 %v540
    %v1637 = vunpack.c.l.b16 %v541
    %v1638 = vunpack.c.l.b16 %v542
    %v1639 = vunpack.c.l.b16 %v543
    %v1640 = vunpack.c.l.b16 %v544
    %v1641 = vunpack.c.l.b16 %v545
    %v1642 = vunpack.c.l.b16 %v546
    %v1643 = vunpack.c.l.b16 %v547
    %v1644 = vunpack.c.l.b16 %v548
    %v1645 = vunpack.c.l.b16 %v549
    %v1646 = vunpack.c.l.b16 %v550
    %v1647 = vunpack.c.l.b16 %v551
    %v1648 = vunpack.c.l.b16 %v552
    %v1649 = vunpack.c.l.b16 %v553
    %v1650 = vunpack.c.l.b16 %v554
    %v1651 = vunpack.c.l.b16 %v555
    %v1652 = vunpack.c.l.b16 %v556
    %v1653 = vunpack.c.l.b16 %v557
    %v1654 = vunpack.c.l.b16 %v558
    %v1655 = vunpack.c.l.b16 %v559
    %v1656 = vunpack.c.l.b16 %v560
    %v1657 = vunpack.c.l.b16 %v561
    %v1658 = vunpack.c.l.b16 %v562
    %v1659 = vunpack.c.l.b16 %v563
    %v1660 = vunpack.c.l.b16 %v564
    %v1661 = vpack.c.b16 %v1150, %v1149
    %v1662 = vpack.c.b16 %v1152, %v1151
    %v1663 = vpack.c.b16 %v1154, %v1153
    %v1664 = vpack.c.b16 %v1156, %v1155
    %v1665 = vpack.c.b16 %v1158, %v1157
    %v1666 = vpack.c.b16 %v1160, %v1159
    %v1667 = vpack.c.b16 %v1162, %v1161
    %v1668 = vpack.c.b16 %v1164, %v1163
    %v1669 = vpack.c.b16 %v1166, %v1165
    %v1670 = vpack.c.b16 %v1168, %v1167
    %v1671 = vpack.c.b16 %v1170, %v1169
    %v1672 = vpack.c.b16 %v1172, %v1171
    %v1673 = vpack.c.b16 %v1174, %v1173
    %v1674 = vpack.c.b16 %v1176, %v1175
    %v1675 = vpack.c.b16 %v1178, %v1177
    %v1676 = vpack.c.b16 %v1180, %v1179
    %v1677 = vpack.c.b16 %v1182, %v1181
    %v1678 = vpack.c.b16 %v1184, %v1183
    %v1679 = vpack.c.b16 %v1186, %v1185
    %v1680 = vpack.c.b16 %v1188, %v1187
    %v1681 = vpack.c.b16 %v1190, %v1189
    %v1682 = vpack.c.b16 %v1192, %v1191
    %v1683 = vpack.c.b16 %v1194, %v1193
    %v1684 = vpack.c.b16 %v1196, %v1195
    %v1685 = vpack.c.b16 %v1198, %v1197
    %v1686 = vpack.c.b16 %v1200, %v1199
    %v1687 = vpack.c.b16 %v1202, %v1201
    %v1688 = vpack.c.b16 %v1204, %v1203
    %v1689 = vpack.c.b16 %v1206, %v1205
    %v1690 = vpack.c.b16 %v1208, %v1207
    %v1691 = vpack.c.b16 %v1210, %v1209
    %v1692 = vpack.c.b16 %v1212, %v1211
    %v1693 = vpack.c.b16 %v1214, %v1213
    %v1694 = vpack.c.b16 %v1216, %v1215
    %v1695 = vpack.c.b16 %v1218, %v1217
    %v1696 = vpack.c.b16 %v1220, %v1219
    %v1697 = vpack.c.b16 %v1222, %v1221
    %v1698 = vpack.c.b16 %v1224, %v1223
    %v1699 = vpack.c.b16 %v1226, %v1225
    %v1700 = vpack.c.b16 %v1228, %v1227
    %v1701 = vpack.c.b16 %v1230, %v1229
    %v1702 = vpack.c.b16 %v1232, %v1231
    %v1703 = vpack.c.b16 %v1234, %v1233
    %v1704 = vpack.c.b16 %v1236, %v1235
    %v1705 = vpack.c.b16 %v1238, %v1237
    %v1706 = vpack.c.b16 %v1240, %v1239
    %v1707 = vpack.c.b16 %v1242, %v1241
    %v1708 = vpack.c.b16 %v1244, %v1243
    %v1709 = vpack.c.b16 %v1246, %v1245
    %v1710 = vpack.c.b16 %v1248, %v1247
    %v1711 = vpack.c.b16 %v1250, %v1249
    %v1712 = vpack.c.b16 %v1252, %v1251
    %v1713 = vpack.c.b16 %v1254, %v1253
    %v1714 = vpack.c.b16 %v1256, %v1255
    %v1715 = vpack.c.b16 %v1258, %v1257
    %v1716 = vpack.c.b16 %v1260, %v1259
    %v1717 = vpack.c.b16 %v1262, %v1261
    %v1718 = vpack.c.b16 %v1264, %v1263
    %v1719 = vpack.c.b16 %v1266, %v1265
    %v1720 = vpack.c.b16 %v1268, %v1267
    %v1721 = vpack.c.b16 %v1270, %v1269
    %v1722 = vpack.c.b16 %v1272, %v1271
    %v1723 = vpack.c.b16 %v1274, %v1273
    %v1724 = vpack.c.b16 %v1276, %v1275
    %v1725 = vpack.c.b16 %v1278, %v1277
    %v1726 = vpack.c.b16 %v1280, %v1279
    %v1727 = vpack.c.b16 %v1282, %v1281
    %v1728 = vpack.c.b16 %v1284, %v1283
    %v1729 = vpack.c.b16 %v1286, %v1285
    %v1730 = vpack.c.b16 %v1288, %v1287
    %v1731 = vpack.c.b16 %v1290, %v1289
    %v1732 = vpack.c.b16 %v1292, %v1291
    %v1733 = vpack.c.b16 %v1294, %v1293
    %v1734 = vpack.c.b16 %v1296, %v1295
    %v1735 = vpack.c.b16 %v1298, %v1297
    %v1736 = vpack.c.b16 %v1300, %v1299
    %v1737 = vpack.c.b16 %v1302, %v1301
    %v1738 = vpack.c.b16 %v1304, %v1303
    %v1739 = vpack.c.b16 %v1306, %v1305
    %v1740 = vpack.c.b16 %v1308, %v1307
    %v1741 = vpack.c.b16 %v1310, %v1309
    %v1742 = vpack.c.b16 %v1312, %v1311
    %v1743 = vpack.c.b16 %v1314, %v1313
    %v1744 = vpack.c.b16 %v1316, %v1315
    %v1745 = vpack.c.b16 %v1318, %v1317
    %v1746 = vpack.c.b16 %v1320, %v1319
    %v1747 = vpack.c.b16 %v1322, %v1321
    %v1748 = vpack.c.b16 %v1324, %v1323
    %v1749 = vpack.c.b16 %v1326, %v1325
    %v1750 = vpack.c.b16 %v1328, %v1327
    %v1751 = vpack.c.b16 %v1330, %v1329
    %v1752 = vpack.c.b16 %v1332, %v1331
    %v1753 = vpack.c.b16 %v1334, %v1333
    %v1754 = vpack.c.b16 %v1336, %v1335
    %v1755 = vpack.c.b16 %v1338, %v1337
    %v1756 = vpack.c.b16 %v1340, %v1339
    %v1757 = vpack.c.b16 %v1342, %v1341
    %v1758 = vpack.c.b16 %v1344, %v1343
    %v1759 = vpack.c.b16 %v1346, %v1345
    %v1760 = vpack.c.b16 %v1348, %v1347
    %v1761 = vpack.c.b16 %v1350, %v1349
    %v1762 = vpack.c.b16 %v1352, %v1351
    %v1763 = vpack.c.b16 %v1354, %v1353
    %v1764 = vpack.c.b16 %v1356, %v1355
    %v1765 = vpack.c.b16 %v1358, %v1357
    %v1766 = vpack.c.b16 %v1360, %v1359
    %v1767 = vpack.c.b16 %v1362, %v1361
    %v1768 = vpack.c.b16 %v1364, %v1363
    %v1769 = vpack.c.b16 %v1366, %v1365
    %v1770 = vpack.c.b16 %v1368, %v1367
    %v1771 = vpack.c.b16 %v1370, %v1369
    %v1772 = vpack.c.b16 %v1372, %v1371
    %v1773 = vpack.c.b16 %v1374, %v1373
    %v1774 = vpack.c.b16 %v1376, %v1375
    %v1775 = vpack.c.b16 %v1378, %v1377
    %v1776 = vpack.c.b16 %v1380, %v1379
    %v1777 = vpack.c.b16 %v1382, %v1381
    %v1778 = vpack.c.b16 %v1384, %v1383
    %v1779 = vpack.c.b16 %v1386, %v1385
    %v1780 = vpack.c.b16 %v1388, %v1387
    %v1781 = vpack.c.b16 %v1390, %v1389
    %v1782 = vpack.c.b16 %v1392, %v1391
    %v1783 = vpack.c.b16 %v1394, %v1393
    %v1784 = vpack.c.b16 %v1396, %v1395
    %v1785 = vpack.c.b16 %v1398, %v1397
    %v1786 = vpack.c.b16 %v1400, %v1399
    %v1787 = vpack.c.b16 %v1402, %v1401
    %v1788 = vpack.c.b16 %v1404, %v1403
    %v1789 = vpack.c.b16 %v1406, %v1405
    %v1790 = vpack.c.b16 %v1408, %v1407
    %v1791 = vpack.c.b16 %v1410, %v1409
    %v1792 = vpack.c.b16 %v1412, %v1411
    %v1793 = vpack.c.b16 %v1414, %v1413
    %v1794 = vpack.c.b16 %v1416, %v1415
    %v1795 = vpack.c.b16 %v1418, %v1417
    %v1796 = vpack.c.b16 %v1420, %v1419
    %v1797 = vpack.c.b16 %v1422, %v1421
    %v1798 = vpack.c.b16 %v1424, %v1423
    %v1799 = vpack.c.b16 %v1426, %v1425
    %v1800 = vpack.c.b16 %v1428, %v1427
    %v1801 = vpack.c.b16 %v1430, %v1429
    %v1802 = vpack.c.b16 %v1432, %v1431
    %v1803 = vpack.c.b16 %v1434, %v1433
    %v1804 = vpack.c.b16 %v1436, %v1435
    %v1805 = vpack.c.b16 %v1438, %v1437
    %v1806 = vpack.c.b16 %v1440, %v1439
    %v1807 = vpack.c.b16 %v1442, %v1441
    %v1808 = vpack.c.b16 %v1444, %v1443
    %v1809 = vpack.c.b16 %v1446, %v1445
    %v1810 = vpack.c.b16 %v1448, %v1447
    %v1811 = vpack.c.b16 %v1450, %v1449
    %v1812 = vpack.c.b16 %v1452, %v1451
    %v1813 = vpack.c.b16 %v1454, %v1453
    %v1814 = vpack.c.b16 %v1456, %v1455
    %v1815 = vpack.c.b16 %v1458, %v1457
    %v1816 = vpack.c.b16 %v1460, %v1459
    %v1817 = vpack.c.b16 %v1462, %v1461
    %v1818 = vpack.c.b16 %v1464, %v1463
    %v1819 = vpack.c.b16 %v1466, %v1465
    %v1820 = vpack.c.b16 %v1468, %v1467
    %v1821 = vpack.c.b16 %v1470, %v1469
    %v1822 = vpack.c.b16 %v1472, %v1471
    %v1823 = vpack.c.b16 %v1474, %v1473
    %v1824 = vpack.c.b16 %v1476, %v1475
    %v1825 = vpack.c.b16 %v1478, %v1477
    %v1826 = vpack.c.b16 %v1480, %v1479
    %v1827 = vpack.c.b16 %v1482, %v1481
    %v1828 = vpack.c.b16 %v1484, %v1483
    %v1829 = vpack.c.b16 %v1486, %v1485
    %v1830 = vpack.c.b16 %v1488, %v1487
    %v1831 = vpack.c.b16 %v1490, %v1489
    %v1832 = vpack.c.b16 %v1492, %v1491
    %v1833 = vpack.c.b16 %v1494, %v1493
    %v1834 = vpack.c.b16 %v1496, %v1495
    %v1835 = vpack.c.b16 %v1498, %v1497
    %v1836 = vpack.c.b16 %v1500, %v1499
    %v1837 = vpack.c.b16 %v1502, %v1501
    %v1838 = vpack.c.b16 %v1504, %v1503
    %v1839 = vpack.c.b16 %v1506, %v1505
    %v1840 = vpack.c.b16 %v1508, %v1507
    %v1841 = vpack.c.b16 %v1510, %v1509
    %v1842 = vpack.c.b16 %v1512, %v1511
    %v1843 = vpack.c.b16 %v1514, %v1513
    %v1844 = vpack.c.b16 %v1516, %v1515
    %v1845 = vpack.c.b16 %v1518, %v1517
    %v1846 = vpack.c.b16 %v1520, %v1519
    %v1847 = vpack.c.b16 %v1522, %v1521
    %v1848 = vpack.c.b16 %v1524, %v1523
    %v1849 = vpack.c.b16 %v1526, %v1525
    %v1850 = vpack.c.b16 %v1528, %v1527
    %v1851 = vpack.c.b16 %v1530, %v1529
    %v1852 = vpack.c.b16 %v1532, %v1531
    %v1853 = vpack.c.b16 %v1534, %v1533
    %v1854 = vpack.c.b16 %v1536, %v1535
    %v1855 = vpack.c.b16 %v1538, %v1537
    %v1856 = vpack.c.b16 %v1540, %v1539
    %v1857 = vpack.c.b16 %v1542, %v1541
    %v1858 = vpack.c.b16 %v1544, %v1543
    %v1859 = vpack.c.b16 %v1546, %v1545
    %v1860 = vpack.c.b16 %v1548, %v1547
    %v1861 = vpack.c.b16 %v1550, %v1549
    %v1862 = vpack.c.b16 %v1552, %v1551
    %v1863 = vpack.c.b16 %v1554, %v1553
    %v1864 = vpack.c.b16 %v1556, %v1555
    %v1865 = vpack.c.b16 %v1558, %v1557
    %v1866 = vpack.c.b16 %v1560, %v1559
    %v1867 = vpack.c.b16 %v1562, %v1561
    %v1868 = vpack.c.b16 %v1564, %v1563
    %v1869 = vpack.c.b16 %v1566, %v1565
    %v1870 = vpack.c.b16 %v1568, %v1567
    %v1871 = vpack.c.b16 %v1570, %v1569
    %v1872 = vpack.c.b16 %v1572, %v1571
    %v1873 = vpack.c.b16 %v1574, %v1573
    %v1874 = vpack.c.b16 %v1576, %v1575
    %v1875 = vpack.c.b16 %v1578, %v1577
    %v1876 = vpack.c.b16 %v1580, %v1579
    %v1877 = vpack.c.b16 %v1582, %v1581
    %v1878 = vpack.c.b16 %v1584, %v1583
    %v1879 = vpack.c.b16 %v1586, %v1585
    %v1880 = vpack.c.b16 %v1588, %v1587
    %v1881 = vpack.c.b16 %v1590, %v1589
    %v1882 = vpack.c.b16 %v1592, %v1591
    %v1883 = vpack.c.b16 %v1594, %v1593
    %v1884 = vpack.c.b16 %v1596, %v1595
    %v1885 = vpack.c.b16 %v1598, %v1597
    %v1886 = vpack.c.b16 %v1600, %v1599
    %v1887 = vpack.c.b16 %v1602, %v1601
    %v1888 = vpack.c.b16 %v1604, %v1603
    %v1889 = vpack.c.b16 %v1606, %v1605
    %v1890 = vpack.c.b16 %v1608, %v1607
    %v1891 = vpack.c.b16 %v1610, %v1609
    %v1892 = vpack.c.b16 %v1612, %v1611
    %v1893 = vpack.c.b16 %v1614, %v1613
    %v1894 = vpack.c.b16 %v1616, %v1615
    %v1895 = vpack.c.b16 %v1618, %v1617
    %v1896 = vpack.c.b16 %v1620, %v1619
    %v1897 = vpack.c.b16 %v1622, %v1621
    %v1898 = vpack.c.b16 %v1624, %v1623
    %v1899 = vpack.c.b16 %v1626, %v1625
    %v1900 = vpack.c.b16 %v1628, %v1627
    %v1901 = vpack.c.b16 %v1630, %v1629
    %v1902 = vpack.c.b16 %v1632, %v1631
    %v1903 = vpack.c.b16 %v1634, %v1633
    %v1904 = vpack.c.b16 %v1636, %v1635
    %v1905 = vpack.c.b16 %v1638, %v1637
    %v1906 = vpack.c.b16 %v1640, %v1639
    %v1907 = vpack.c.b16 %v1642, %v1641
    %v1908 = vpack.c.b16 %v1644, %v1643
    %v1909 = vpack.c.b16 %v1646, %v1645
    %v1910 = vpack.c.b16 %v1648, %v1647
    %v1911 = vpack.c.b16 %v1650, %v1649
    %v1912 = vpack.c.b16 %v1652, %v1651
    %v1913 = vpack.c.b16 %v1654, %v1653
    %v1914 = vpack.c.b16 %v1656, %v1655
    %v1915 = vpack.c.b16 %v1658, %v1657
    %v1916 = vpack.c.b16 %v1660, %v1659
    %2173 = vmatpush.bf16.msra.mxu0 %v1668
    %2174 = vmatpush.bf16.msra.mxu0 %v1667
    %2175 = vmatpush.bf16.msra.mxu0 %v1666
    %2176 = vmatpush.bf16.msra.mxu0 %v1665
    %2177 = vmatpush.bf16.msra.mxu0 %v1664
    %2178 = vmatpush.bf16.msra.mxu0 %v1663
    %2179 = vmatpush.bf16.msra.mxu0 %v1662
    %2180 = vmatpush.bf16.msra.mxu0 %v1661
    %2181 = vmatmul.bf16.gmra.mxu0 %v567
    %v2182 = vpop.f32.mrf.mxu0
    %v2183 = vadd.f32 0.0, %v2182
    %v2184 = vpop.f32.mrf.mxu0
    %2185 = vdwg.mxu0
    %2186 = vmatpush.bf16.msra.mxu0 %v1676
    %2187 = vmatpush.bf16.msra.mxu0 %v1675
    %2188 = vmatpush.bf16.msra.mxu0 %v1674
    %2189 = vmatpush.bf16.msra.mxu0 %v1673
    %2190 = vmatpush.bf16.msra.mxu0 %v1672
    %2191 = vmatpush.bf16.msra.mxu0 %v1671
    %2192 = vmatpush.bf16.msra.mxu0 %v1670
    %2193 = vmatpush.bf16.msra.mxu0 %v1669
    %2194 = vmatmul.bf16.gmra.mxu0 %v568
    %v2195 = vpop.f32.mrf.mxu0
    %v2196 = vadd.f32 %v2183, %v2195
    %v2197 = vpop.f32.mrf.mxu0
    %2198 = vdwg.mxu0
    %2199 = vmatpush.bf16.msra.mxu0 %v1684
    %2200 = vmatpush.bf16.msra.mxu0 %v1683
    %2201 = vmatpush.bf16.msra.mxu0 %v1682
    %2202 = vmatpush.bf16.msra.mxu0 %v1681
    %2203 = vmatpush.bf16.msra.mxu0 %v1680
    %2204 = vmatpush.bf16.msra.mxu0 %v1679
    %2205 = vmatpush.bf16.msra.mxu0 %v1678
    %2206 = vmatpush.bf16.msra.mxu0 %v1677
    %2207 = vmatmul.bf16.gmra.mxu0 %v569
    %v2208 = vpop.f32.mrf.mxu0
    %v2209 = vadd.f32 %v2196, %v2208
    %v2210 = vpop.f32.mrf.mxu0
    %2211 = vdwg.mxu0
    %2212 = vmatpush.bf16.msra.mxu0 %v1692
    %2213 = vmatpush.bf16.msra.mxu0 %v1691
    %2214 = vmatpush.bf16.msra.mxu0 %v1690
    %2215 = vmatpush.bf16.msra.mxu0 %v1689
    %2216 = vmatpush.bf16.msra.mxu0 %v1688
    %2217 = vmatpush.bf16.msra.mxu0 %v1687
    %2218 = vmatpush.bf16.msra.mxu0 %v1686
    %2219 = vmatpush.bf16.msra.mxu0 %v1685
    %2220 = vmatmul.bf16.gmra.mxu0 %v570
    %v2221 = vpop.f32.mrf.mxu0
    %v2222 = vadd.f32 %v2209, %v2221
    %v2223 = vpop.f32.mrf.mxu0
    %2224 = vdwg.mxu0
    %2225 = vmatpush.bf16.msra.mxu0 %v1700
    %2226 = vmatpush.bf16.msra.mxu0 %v1699
    %2227 = vmatpush.bf16.msra.mxu0 %v1698
    %2228 = vmatpush.bf16.msra.mxu0 %v1697
    %2229 = vmatpush.bf16.msra.mxu0 %v1696
    %2230 = vmatpush.bf16.msra.mxu0 %v1695
    %2231 = vmatpush.bf16.msra.mxu0 %v1694
    %2232 = vmatpush.bf16.msra.mxu0 %v1693
    %2233 = vmatmul.bf16.gmra.mxu0 %v571
    %v2234 = vpop.f32.mrf.mxu0
    %v2235 = vadd.f32 %v2222, %v2234
    %v2236 = vpop.f32.mrf.mxu0
    %2237 = vdwg.mxu0
    %2238 = vmatpush.bf16.msra.mxu0 %v1708
    %2239 = vmatpush.bf16.msra.mxu0 %v1707
    %2240 = vmatpush.bf16.msra.mxu0 %v1706
    %2241 = vmatpush.bf16.msra.mxu0 %v1705
    %2242 = vmatpush.bf16.msra.mxu0 %v1704
    %2243 = vmatpush.bf16.msra.mxu0 %v1703
    %2244 = vmatpush.bf16.msra.mxu0 %v1702
    %2245 = vmatpush.bf16.msra.mxu0 %v1701
    %2246 = vmatmul.bf16.gmra.mxu0 %v572
    %v2247 = vpop.f32.mrf.mxu0
    %v2248 = vadd.f32 %v2235, %v2247
    %v2249 = vpop.f32.mrf.mxu0
    %2250 = vdwg.mxu0
    %2251 = vmatpush.bf16.msra.mxu0 %v1716
    %2252 = vmatpush.bf16.msra.mxu0 %v1715
    %2253 = vmatpush.bf16.msra.mxu0 %v1714
    %2254 = vmatpush.bf16.msra.mxu0 %v1713
    %2255 = vmatpush.bf16.msra.mxu0 %v1712
    %2256 = vmatpush.bf16.msra.mxu0 %v1711
    %2257 = vmatpush.bf16.msra.mxu0 %v1710
    %2258 = vmatpush.bf16.msra.mxu0 %v1709
    %2259 = vmatmul.bf16.gmra.mxu0 %v573
    %v2260 = vpop.f32.mrf.mxu0
    %v2261 = vadd.f32 %v2248, %v2260
    %v2262 = vpop.f32.mrf.mxu0
    %2263 = vdwg.mxu0
    %2264 = vmatpush.bf16.msra.mxu0 %v1724
    %2265 = vmatpush.bf16.msra.mxu0 %v1723
    %2266 = vmatpush.bf16.msra.mxu0 %v1722
    %2267 = vmatpush.bf16.msra.mxu0 %v1721
    %2268 = vmatpush.bf16.msra.mxu0 %v1720
    %2269 = vmatpush.bf16.msra.mxu0 %v1719
    %2270 = vmatpush.bf16.msra.mxu0 %v1718
    %2271 = vmatpush.bf16.msra.mxu0 %v1717
    %2272 = vmatmul.bf16.gmra.mxu0 %v574
    %v2273 = vpop.f32.mrf.mxu0
    %v2274 = vadd.f32 %v2261, %v2273
    %v2275 = vpop.f32.mrf.mxu0
    %2276 = vdwg.mxu0
    %2277 = vmatpush.bf16.msra.mxu0 %v1732
    %2278 = vmatpush.bf16.msra.mxu0 %v1731
    %2279 = vmatpush.bf16.msra.mxu0 %v1730
    %2280 = vmatpush.bf16.msra.mxu0 %v1729
    %2281 = vmatpush.bf16.msra.mxu0 %v1728
    %2282 = vmatpush.bf16.msra.mxu0 %v1727
    %2283 = vmatpush.bf16.msra.mxu0 %v1726
    %2284 = vmatpush.bf16.msra.mxu0 %v1725
    %2285 = vmatmul.bf16.gmra.mxu0 %v577
    %v2286 = vpop.f32.mrf.mxu0
    %v2287 = vadd.f32 %v2274, %v2286
    %v2288 = vpop.f32.mrf.mxu0
    %2289 = vdwg.mxu0
    %2290 = vmatpush.bf16.msra.mxu0 %v1740
    %2291 = vmatpush.bf16.msra.mxu0 %v1739
    %2292 = vmatpush.bf16.msra.mxu0 %v1738
    %2293 = vmatpush.bf16.msra.mxu0 %v1737
    %2294 = vmatpush.bf16.msra.mxu0 %v1736
    %2295 = vmatpush.bf16.msra.mxu0 %v1735
    %2296 = vmatpush.bf16.msra.mxu0 %v1734
    %2297 = vmatpush.bf16.msra.mxu0 %v1733
    %2298 = vmatmul.bf16.gmra.mxu0 %v578
    %v2299 = vpop.f32.mrf.mxu0
    %v2300 = vadd.f32 %v2287, %v2299
    %v2301 = vpop.f32.mrf.mxu0
    %2302 = vdwg.mxu0
    %2303 = vmatpush.bf16.msra.mxu0 %v1748
    %2304 = vmatpush.bf16.msra.mxu0 %v1747
    %2305 = vmatpush.bf16.msra.mxu0 %v1746
    %2306 = vmatpush.bf16.msra.mxu0 %v1745
    %2307 = vmatpush.bf16.msra.mxu0 %v1744
    %2308 = vmatpush.bf16.msra.mxu0 %v1743
    %2309 = vmatpush.bf16.msra.mxu0 %v1742
    %2310 = vmatpush.bf16.msra.mxu0 %v1741
    %2311 = vmatmul.bf16.gmra.mxu0 %v579
    %v2312 = vpop.f32.mrf.mxu0
    %v2313 = vadd.f32 %v2300, %v2312
    %v2314 = vpop.f32.mrf.mxu0
    %2315 = vdwg.mxu0
    %2316 = vmatpush.bf16.msra.mxu0 %v1756
    %2317 = vmatpush.bf16.msra.mxu0 %v1755
    %2318 = vmatpush.bf16.msra.mxu0 %v1754
    %2319 = vmatpush.bf16.msra.mxu0 %v1753
    %2320 = vmatpush.bf16.msra.mxu0 %v1752
    %2321 = vmatpush.bf16.msra.mxu0 %v1751
    %2322 = vmatpush.bf16.msra.mxu0 %v1750
    %2323 = vmatpush.bf16.msra.mxu0 %v1749
    %2324 = vmatmul.bf16.gmra.mxu0 %v580
    %v2325 = vpop.f32.mrf.mxu0
    %v2326 = vadd.f32 %v2313, %v2325
    %v2327 = vpop.f32.mrf.mxu0
    %2328 = vdwg.mxu0
    %2329 = vmatpush.bf16.msra.mxu0 %v1764
    %2330 = vmatpush.bf16.msra.mxu0 %v1763
    %2331 = vmatpush.bf16.msra.mxu0 %v1762
    %2332 = vmatpush.bf16.msra.mxu0 %v1761
    %2333 = vmatpush.bf16.msra.mxu0 %v1760
    %2334 = vmatpush.bf16.msra.mxu0 %v1759
    %2335 = vmatpush.bf16.msra.mxu0 %v1758
    %2336 = vmatpush.bf16.msra.mxu0 %v1757
    %2337 = vmatmul.bf16.gmra.mxu0 %v581
    %v2338 = vpop.f32.mrf.mxu0
    %v2339 = vadd.f32 %v2326, %v2338
    %v2340 = vpop.f32.mrf.mxu0
    %2341 = vdwg.mxu0
    %2342 = vmatpush.bf16.msra.mxu0 %v1772
    %2343 = vmatpush.bf16.msra.mxu0 %v1771
    %2344 = vmatpush.bf16.msra.mxu0 %v1770
    %2345 = vmatpush.bf16.msra.mxu0 %v1769
    %2346 = vmatpush.bf16.msra.mxu0 %v1768
    %2347 = vmatpush.bf16.msra.mxu0 %v1767
    %2348 = vmatpush.bf16.msra.mxu0 %v1766
    %2349 = vmatpush.bf16.msra.mxu0 %v1765
    %2350 = vmatmul.bf16.gmra.mxu0 %v582
    %v2351 = vpop.f32.mrf.mxu0
    %v2352 = vadd.f32 %v2339, %v2351
    %v2353 = vpop.f32.mrf.mxu0
    %2354 = vdwg.mxu0
    %2355 = vmatpush.bf16.msra.mxu0 %v1780
    %2356 = vmatpush.bf16.msra.mxu0 %v1779
    %2357 = vmatpush.bf16.msra.mxu0 %v1778
    %2358 = vmatpush.bf16.msra.mxu0 %v1777
    %2359 = vmatpush.bf16.msra.mxu0 %v1776
    %2360 = vmatpush.bf16.msra.mxu0 %v1775
    %2361 = vmatpush.bf16.msra.mxu0 %v1774
    %2362 = vmatpush.bf16.msra.mxu0 %v1773
    %2363 = vmatmul.bf16.gmra.mxu0 %v583
    %v2364 = vpop.f32.mrf.mxu0
    %v2365 = vadd.f32 %v2352, %v2364
    %v2366 = vpop.f32.mrf.mxu0
    %2367 = vdwg.mxu0
    %2368 = vmatpush.bf16.msra.mxu0 %v1788
    %2369 = vmatpush.bf16.msra.mxu0 %v1787
    %2370 = vmatpush.bf16.msra.mxu0 %v1786
    %2371 = vmatpush.bf16.msra.mxu0 %v1785
    %2372 = vmatpush.bf16.msra.mxu0 %v1784
    %2373 = vmatpush.bf16.msra.mxu0 %v1783
    %2374 = vmatpush.bf16.msra.mxu0 %v1782
    %2375 = vmatpush.bf16.msra.mxu0 %v1781
    %2376 = vmatmul.bf16.gmra.mxu0 %v584
    %v2377 = vpop.f32.mrf.mxu0
    %v2378 = vadd.f32 %v2365, %v2377
    %v2379 = vpop.f32.mrf.mxu0
    %2380 = vdwg.mxu0
    %2381 = vmatpush.bf16.msra.mxu0 %v1796
    %2382 = vmatpush.bf16.msra.mxu0 %v1795
    %2383 = vmatpush.bf16.msra.mxu0 %v1794
    %2384 = vmatpush.bf16.msra.mxu0 %v1793
    %2385 = vmatpush.bf16.msra.mxu0 %v1792
    %2386 = vmatpush.bf16.msra.mxu0 %v1791
    %2387 = vmatpush.bf16.msra.mxu0 %v1790
    %2388 = vmatpush.bf16.msra.mxu0 %v1789
    %2389 = vmatmul.bf16.gmra.mxu0 %v587
    %v2390 = vpop.f32.mrf.mxu0
    %v2391 = vadd.f32 %v2378, %v2390
    %v2392 = vpop.f32.mrf.mxu0
    %2393 = vdwg.mxu0
    %2394 = vmatpush.bf16.msra.mxu0 %v1804
    %2395 = vmatpush.bf16.msra.mxu0 %v1803
    %2396 = vmatpush.bf16.msra.mxu0 %v1802
    %2397 = vmatpush.bf16.msra.mxu0 %v1801
    %2398 = vmatpush.bf16.msra.mxu0 %v1800
    %2399 = vmatpush.bf16.msra.mxu0 %v1799
    %2400 = vmatpush.bf16.msra.mxu0 %v1798
    %2401 = vmatpush.bf16.msra.mxu0 %v1797
    %2402 = vmatmul.bf16.gmra.mxu0 %v588
    %v2403 = vpop.f32.mrf.mxu0
    %v2404 = vadd.f32 %v2391, %v2403
    %v2405 = vpop.f32.mrf.mxu0
    %2406 = vdwg.mxu0
    %2407 = vmatpush.bf16.msra.mxu0 %v1812
    %2408 = vmatpush.bf16.msra.mxu0 %v1811
    %2409 = vmatpush.bf16.msra.mxu0 %v1810
    %2410 = vmatpush.bf16.msra.mxu0 %v1809
    %2411 = vmatpush.bf16.msra.mxu0 %v1808
    %2412 = vmatpush.bf16.msra.mxu0 %v1807
    %2413 = vmatpush.bf16.msra.mxu0 %v1806
    %2414 = vmatpush.bf16.msra.mxu0 %v1805
    %2415 = vmatmul.bf16.gmra.mxu0 %v589
    %v2416 = vpop.f32.mrf.mxu0
    %v2417 = vadd.f32 %v2404, %v2416
    %v2418 = vpop.f32.mrf.mxu0
    %2419 = vdwg.mxu0
    %2420 = vmatpush.bf16.msra.mxu0 %v1820
    %2421 = vmatpush.bf16.msra.mxu0 %v1819
    %2422 = vmatpush.bf16.msra.mxu0 %v1818
    %2423 = vmatpush.bf16.msra.mxu0 %v1817
    %2424 = vmatpush.bf16.msra.mxu0 %v1816
    %2425 = vmatpush.bf16.msra.mxu0 %v1815
    %2426 = vmatpush.bf16.msra.mxu0 %v1814
    %2427 = vmatpush.bf16.msra.mxu0 %v1813
    %2428 = vmatmul.bf16.gmra.mxu0 %v590
    %v2429 = vpop.f32.mrf.mxu0
    %v2430 = vadd.f32 %v2417, %v2429
    %v2431 = vpop.f32.mrf.mxu0
    %2432 = vdwg.mxu0
    %2433 = vmatpush.bf16.msra.mxu0 %v1828
    %2434 = vmatpush.bf16.msra.mxu0 %v1827
    %2435 = vmatpush.bf16.msra.mxu0 %v1826
    %2436 = vmatpush.bf16.msra.mxu0 %v1825
    %2437 = vmatpush.bf16.msra.mxu0 %v1824
    %2438 = vmatpush.bf16.msra.mxu0 %v1823
    %2439 = vmatpush.bf16.msra.mxu0 %v1822
    %2440 = vmatpush.bf16.msra.mxu0 %v1821
    %2441 = vmatmul.bf16.gmra.mxu0 %v591
    %v2442 = vpop.f32.mrf.mxu0
    %v2443 = vadd.f32 %v2430, %v2442
    %v2444 = vpop.f32.mrf.mxu0
    %2445 = vdwg.mxu0
    %2446 = vmatpush.bf16.msra.mxu0 %v1836
    %2447 = vmatpush.bf16.msra.mxu0 %v1835
    %2448 = vmatpush.bf16.msra.mxu0 %v1834
    %2449 = vmatpush.bf16.msra.mxu0 %v1833
    %2450 = vmatpush.bf16.msra.mxu0 %v1832
    %2451 = vmatpush.bf16.msra.mxu0 %v1831
    %2452 = vmatpush.bf16.msra.mxu0 %v1830
    %2453 = vmatpush.bf16.msra.mxu0 %v1829
    %2454 = vmatmul.bf16.gmra.mxu0 %v592
    %v2455 = vpop.f32.mrf.mxu0
    %v2456 = vadd.f32 %v2443, %v2455
    %v2457 = vpop.f32.mrf.mxu0
    %2458 = vdwg.mxu0
    %2459 = vmatpush.bf16.msra.mxu0 %v1844
    %2460 = vmatpush.bf16.msra.mxu0 %v1843
    %2461 = vmatpush.bf16.msra.mxu0 %v1842
    %2462 = vmatpush.bf16.msra.mxu0 %v1841
    %2463 = vmatpush.bf16.msra.mxu0 %v1840
    %2464 = vmatpush.bf16.msra.mxu0 %v1839
    %2465 = vmatpush.bf16.msra.mxu0 %v1838
    %2466 = vmatpush.bf16.msra.mxu0 %v1837
    %2467 = vmatmul.bf16.gmra.mxu0 %v593
    %v2468 = vpop.f32.mrf.mxu0
    %v2469 = vadd.f32 %v2456, %v2468
    %v2470 = vpop.f32.mrf.mxu0
    %2471 = vdwg.mxu0
    %2472 = vmatpush.bf16.msra.mxu0 %v1852
    %2473 = vmatpush.bf16.msra.mxu0 %v1851
    %2474 = vmatpush.bf16.msra.mxu0 %v1850
    %2475 = vmatpush.bf16.msra.mxu0 %v1849
    %2476 = vmatpush.bf16.msra.mxu0 %v1848
    %2477 = vmatpush.bf16.msra.mxu0 %v1847
    %2478 = vmatpush.bf16.msra.mxu0 %v1846
    %2479 = vmatpush.bf16.msra.mxu0 %v1845
    %2480 = vmatmul.bf16.gmra.mxu0 %v594
    %v2481 = vpop.f32.mrf.mxu0
    %v2482 = vadd.f32 %v2469, %v2481
    %v2483 = vpop.f32.mrf.mxu0
    %2484 = vdwg.mxu0
    %2485 = vmatpush.bf16.msra.mxu0 %v1860
    %2486 = vmatpush.bf16.msra.mxu0 %v1859
    %2487 = vmatpush.bf16.msra.mxu0 %v1858
    %2488 = vmatpush.bf16.msra.mxu0 %v1857
    %2489 = vmatpush.bf16.msra.mxu0 %v1856
    %2490 = vmatpush.bf16.msra.mxu0 %v1855
    %2491 = vmatpush.bf16.msra.mxu0 %v1854
    %2492 = vmatpush.bf16.msra.mxu0 %v1853
    %2493 = vmatmul.bf16.gmra.mxu0 %v597
    %v2494 = vpop.f32.mrf.mxu0
    %v2495 = vadd.f32 %v2482, %v2494
    %v2496 = vpop.f32.mrf.mxu0
    %2497 = vdwg.mxu0
    %2498 = vmatpush.bf16.msra.mxu0 %v1868
    %2499 = vmatpush.bf16.msra.mxu0 %v1867
    %2500 = vmatpush.bf16.msra.mxu0 %v1866
    %2501 = vmatpush.bf16.msra.mxu0 %v1865
    %2502 = vmatpush.bf16.msra.mxu0 %v1864
    %2503 = vmatpush.bf16.msra.mxu0 %v1863
    %2504 = vmatpush.bf16.msra.mxu0 %v1862
    %2505 = vmatpush.bf16.msra.mxu0 %v1861
    %2506 = vmatmul.bf16.gmra.mxu0 %v598
    %v2507 = vpop.f32.mrf.mxu0
    %v2508 = vadd.f32 %v2495, %v2507
    %v2509 = vpop.f32.mrf.mxu0
    %2510 = vdwg.mxu0
    %2511 = vmatpush.bf16.msra.mxu0 %v1876
    %2512 = vmatpush.bf16.msra.mxu0 %v1875
    %2513 = vmatpush.bf16.msra.mxu0 %v1874
    %2514 = vmatpush.bf16.msra.mxu0 %v1873
    %2515 = vmatpush.bf16.msra.mxu0 %v1872
    %2516 = vmatpush.bf16.msra.mxu0 %v1871
    %2517 = vmatpush.bf16.msra.mxu0 %v1870
    %2518 = vmatpush.bf16.msra.mxu0 %v1869
    %2519 = vmatmul.bf16.gmra.mxu0 %v599
    %v2520 = vpop.f32.mrf.mxu0
    %v2521 = vadd.f32 %v2508, %v2520
    %v2522 = vpop.f32.mrf.mxu0
    %2523 = vdwg.mxu0
    %2524 = vmatpush.bf16.msra.mxu0 %v1884
    %2525 = vmatpush.bf16.msra.mxu0 %v1883
    %2526 = vmatpush.bf16.msra.mxu0 %v1882
    %2527 = vmatpush.bf16.msra.mxu0 %v1881
    %2528 = vmatpush.bf16.msra.mxu0 %v1880
    %2529 = vmatpush.bf16.msra.mxu0 %v1879
    %2530 = vmatpush.bf16.msra.mxu0 %v1878
    %2531 = vmatpush.bf16.msra.mxu0 %v1877
    %2532 = vmatmul.bf16.gmra.mxu0 %v600
    %v2533 = vpop.f32.mrf.mxu0
    %v2534 = vadd.f32 %v2521, %v2533
    %v2535 = vpop.f32.mrf.mxu0
    %2536 = vdwg.mxu0
    %2537 = vmatpush.bf16.msra.mxu0 %v1892
    %2538 = vmatpush.bf16.msra.mxu0 %v1891
    %2539 = vmatpush.bf16.msra.mxu0 %v1890
    %2540 = vmatpush.bf16.msra.mxu0 %v1889
    %2541 = vmatpush.bf16.msra.mxu0 %v1888
    %2542 = vmatpush.bf16.msra.mxu0 %v1887
    %2543 = vmatpush.bf16.msra.mxu0 %v1886
    %2544 = vmatpush.bf16.msra.mxu0 %v1885
    %2545 = vmatmul.bf16.gmra.mxu0 %v601
    %v2546 = vpop.f32.mrf.mxu0
    %v2547 = vadd.f32 %v2534, %v2546
    %v2548 = vpop.f32.mrf.mxu0
    %2549 = vdwg.mxu0
    %2550 = vmatpush.bf16.msra.mxu0 %v1900
    %2551 = vmatpush.bf16.msra.mxu0 %v1899
    %2552 = vmatpush.bf16.msra.mxu0 %v1898
    %2553 = vmatpush.bf16.msra.mxu0 %v1897
    %2554 = vmatpush.bf16.msra.mxu0 %v1896
    %2555 = vmatpush.bf16.msra.mxu0 %v1895
    %2556 = vmatpush.bf16.msra.mxu0 %v1894
    %2557 = vmatpush.bf16.msra.mxu0 %v1893
    %2558 = vmatmul.bf16.gmra.mxu0 %v602
    %v2559 = vpop.f32.mrf.mxu0
    %v2560 = vadd.f32 %v2547, %v2559
    %v2561 = vpop.f32.mrf.mxu0
    %2562 = vdwg.mxu0
    %2563 = vmatpush.bf16.msra.mxu0 %v1908
    %2564 = vmatpush.bf16.msra.mxu0 %v1907
    %2565 = vmatpush.bf16.msra.mxu0 %v1906
    %2566 = vmatpush.bf16.msra.mxu0 %v1905
    %2567 = vmatpush.bf16.msra.mxu0 %v1904
    %2568 = vmatpush.bf16.msra.mxu0 %v1903
    %2569 = vmatpush.bf16.msra.mxu0 %v1902
    %2570 = vmatpush.bf16.msra.mxu0 %v1901
    %2571 = vmatmul.bf16.gmra.mxu0 %v603
    %v2572 = vpop.f32.mrf.mxu0
    %v2573 = vadd.f32 %v2560, %v2572
    %v2574 = vpop.f32.mrf.mxu0
    %2575 = vdwg.mxu0
    %2576 = vmatpush.bf16.msra.mxu0 %v1916
    %2577 = vmatpush.bf16.msra.mxu0 %v1915
    %2578 = vmatpush.bf16.msra.mxu0 %v1914
    %2579 = vmatpush.bf16.msra.mxu0 %v1913
    %2580 = vmatpush.bf16.msra.mxu0 %v1912
    %2581 = vmatpush.bf16.msra.mxu0 %v1911
    %2582 = vmatpush.bf16.msra.mxu0 %v1910
    %2583 = vmatpush.bf16.msra.mxu0 %v1909
    %2584 = vmatmul.bf16.gmra.mxu0 %v604
    %v2585 = vpop.f32.mrf.mxu0
    %v2586 = vadd.f32 %v2573, %v2585
    %v2587 = vpop.f32.mrf.mxu0
    %2588 = vdwg.mxu0
    %v2589 = vpack.c.bf16 %v2586, %v2586
    %v2590 = vld [vmem:[%s2] sm:$0xf]
    %v2591 = vld [vmem:[%s2 + $0x4] sm:$0xf]
    %v2592 = vld [vmem:[%s2 + $0x8] sm:$0xf]
    %v2593 = vld [vmem:[%s2 + $0xc] sm:$0xf]
    %v2594 = vld [vmem:[%s7] sm:$0x3]
    %v2595 = vpack.c.bf16 %v2594, %v2594
    %v2596 = vld [vmem:[%s3] sm:$0xf]
    %v2597 = vld [vmem:[%s3 + $0x4] sm:$0xf]
    %v2598 = vld [vmem:[%s3 + $0x8] sm:$0xf]
    %v2599 = vld [vmem:[%s3 + $0xc] sm:$0xf]
    %v2600 = vld [vmem:[%s3 + $0x10] sm:$0x3]
    %v2606 = vunpack.c.l.b16 %v2596
    %v2607 = vunpack.c.l.b16 %v2597
    %v2608 = vunpack.c.l.b16 %v2598
    %v2609 = vunpack.c.l.b16 %v2599
    %v2610 = vunpack.c.l.b16 %v2600
    %v2611 = vpack.c.b16 %v2607, %v2606
    %v2612 = vpack.c.b16 %v2609, %v2608
    %v2613 = vpack.c.b16 %v2610, %v2610
    %vm2616 = vcmask 285696
    %v2618 = vsel %vm2616, %v2595, 0
    %vm2620 = vcmask 1040384
    %vm2621 = vcmask 1041408
    %v2622 = vsel %vm2620, 4294967295, 65535
    %v2623 = vsel %vm2621, %v2622, 0
    %v2625 = vand.u32 %v2613, %v2623
    %2627 = vmatpush.bf16.msra.mxu0 0
    %2628 = vmatpush.bf16.msra.mxu0 0
    %2629 = vmatpush.bf16.msra.mxu0 0
    %2630 = vmatpush.bf16.msra.mxu0 0
    %2631 = vmatpush.bf16.msra.mxu0 0
    %2632 = vmatpush.bf16.msra.mxu0 %v2625
    %2633 = vmatpush.bf16.msra.mxu0 %v2612
    %2634 = vmatpush.bf16.msra.mxu0 %v2611
    %2635 = vmatmul.bf16.gmra.mxu0 %v2618
    %v2636 = vpop.f32.mrf.mxu0
    %v2637 = vadd.f32 0.0, %v2636
    %v2638 = vpop.f32.mrf.mxu0
    %2639 = vdwg.mxu0
    %v2644 = vunpack.c.l.b16 %v2590
    %v2645 = vunpack.c.l.b16 %v2591
    %v2646 = vunpack.c.l.b16 %v2592
    %v2647 = vunpack.c.l.b16 %v2593
    %v2648 = vpack.c.b16 %v2645, %v2644
    %v2649 = vpack.c.b16 %v2647, %v2646
    %vm2652 = vcmask 261120
    %v2654 = vsel %vm2652, %v2589, 0
    %2656 = vmatpush.bf16.msra.mxu0 0
    %2657 = vmatpush.bf16.msra.mxu0 0
    %2658 = vmatpush.bf16.msra.mxu0 0
    %2659 = vmatpush.bf16.msra.mxu0 0
    %2660 = vmatpush.bf16.msra.mxu0 0
    %2661 = vmatpush.bf16.msra.mxu0 0
    %2662 = vmatpush.bf16.msra.mxu0 %v2649
    %2663 = vmatpush.bf16.msra.mxu0 %v2648
    %2664 = vmatmul.bf16.gmra.mxu0 %v2654
    %v2665 = vpop.f32.mrf.mxu0
    %v2666 = vadd.f32 %v2637, %v2665
    %v2667 = vpop.f32.mrf.mxu0
    %2668 = vdwg.mxu0
    %v2669 = vld [vmem:[%s4] sm:$0x1]
    %v2671 = vperm.slane %v2669, 0
    %v2673 = vadd.f32 %v2666, %v2671
    %v2674 = vmax.f32 %v2673, 0.0
    %v2675 = vpack.c.bf16 %v2674, %v2674
    %v2676 = vld [vmem:[%s5] sm:$0xf]
    %v2677 = vld [vmem:[%s5 + $0x4] sm:$0xf]
    %v2678 = vld [vmem:[%s5 + $0x8] sm:$0xf]
    %v2679 = vld [vmem:[%s5 + $0xc] sm:$0xf]
    %v2680 = vld [vmem:[%s5 + $0x10] sm:$0xf]
    %v2681 = vld [vmem:[%s5 + $0x14] sm:$0xf]
    %v2682 = vld [vmem:[%s5 + $0x18] sm:$0xf]
    %v2683 = vld [vmem:[%s5 + $0x1c] sm:$0xf]
    %v2684 = vld [vmem:[%s6] sm:$0x1]
    %v2686 = vperm.slane %v2684, 0
    %v2696 = vunpack.c.l.b16 %v2676
    %v2697 = vunpack.c.l.b16 %v2677
    %v2698 = vunpack.c.l.b16 %v2678
    %v2699 = vunpack.c.l.b16 %v2679
    %v2700 = vunpack.c.l.b16 %v2680
    %v2701 = vunpack.c.l.b16 %v2681
    %v2702 = vunpack.c.l.b16 %v2682
    %v2703 = vunpack.c.l.b16 %v2683
    %v2704 = vpack.c.b16 %v2697, %v2696
    %v2705 = vpack.c.b16 %v2699, %v2698
    %v2706 = vpack.c.b16 %v2701, %v2700
    %v2707 = vpack.c.b16 %v2703, %v2702
    %vm2712 = vcmask 523264
    %v2714 = vsel %vm2712, %v2675, 0
    %2716 = vmatpush.bf16.msra.mxu0 0
    %2717 = vmatpush.bf16.msra.mxu0 0
    %2718 = vmatpush.bf16.msra.mxu0 0
    %2719 = vmatpush.bf16.msra.mxu0 0
    %2720 = vmatpush.bf16.msra.mxu0 %v2707
    %2721 = vmatpush.bf16.msra.mxu0 %v2706
    %2722 = vmatpush.bf16.msra.mxu0 %v2705
    %2723 = vmatpush.bf16.msra.mxu0 %v2704
    %2724 = vmatmul.bf16.gmra.mxu0 %v2714
    %v2725 = vpop.f32.mrf.mxu0
    %v2726 = vadd.f32 %v2686, %v2725
    %v2727 = vpop.f32.mrf.mxu0
    %2728 = vdwg.mxu0
    %v2729 = vmax.f32 %v2726, 0.0
    %v2730 = vpack.c.bf16 %v2729, %v2729
    %v2731 = vld [vmem:[%s9] sm:$0xf]
    %v2732 = vld [vmem:[%s9 + $0x4] sm:$0xf]
    %v2733 = vld [vmem:[%s9 + $0x8] sm:$0xf]
    %v2734 = vld [vmem:[%s9 + $0xc] sm:$0xf]
    %v2735 = vld [vmem:[%s9 + $0x10] sm:$0xf]
    %v2736 = vld [vmem:[%s9 + $0x14] sm:$0xf]
    %v2737 = vld [vmem:[%s9 + $0x18] sm:$0xf]
    %v2738 = vld [vmem:[%s9 + $0x1c] sm:$0xf]
    %v2739 = vld [vmem:[%s10] sm:$0x1]
    %v2741 = vperm.slane %v2739, 0
    %v2751 = vunpack.c.l.b16 %v2731
    %v2752 = vunpack.c.l.b16 %v2732
    %v2753 = vunpack.c.l.b16 %v2733
    %v2754 = vunpack.c.l.b16 %v2734
    %v2755 = vunpack.c.l.b16 %v2735
    %v2756 = vunpack.c.l.b16 %v2736
    %v2757 = vunpack.c.l.b16 %v2737
    %v2758 = vunpack.c.l.b16 %v2738
    %v2759 = vpack.c.b16 %v2752, %v2751
    %v2760 = vpack.c.b16 %v2754, %v2753
    %v2761 = vpack.c.b16 %v2756, %v2755
    %v2762 = vpack.c.b16 %v2758, %v2757
    %v2768 = vsel %vm2712, %v2730, 0
    %2770 = vmatpush.bf16.msra.mxu0 0
    %2771 = vmatpush.bf16.msra.mxu0 0
    %2772 = vmatpush.bf16.msra.mxu0 0
    %2773 = vmatpush.bf16.msra.mxu0 0
    %2774 = vmatpush.bf16.msra.mxu0 %v2762
    %2775 = vmatpush.bf16.msra.mxu0 %v2761
    %2776 = vmatpush.bf16.msra.mxu0 %v2760
    %2777 = vmatpush.bf16.msra.mxu0 %v2759
    %2778 = vmatmul.bf16.gmra.mxu0 %v2768
    %v2779 = vpop.f32.mrf.mxu0
    %v2780 = vadd.f32 %v2741, %v2779
    %v2781 = vpop.f32.mrf.mxu0
    %2782 = vdwg.mxu0
    %v2783 = vxor.u32 %v2780, 2147483648
    %v2784 = vmul.f32 %v2783, 1.442695
    %v2785 = vpow.pop %v2784
    %v2786 = vadd.f32 %v2785, 1.0
    %v2787 = vrcp.pop %v2786
    %v2788 = vmul.f32 %v2786, %v2787
    %v2789 = vsub.f32 1.0, %v2788
    %v2790 = vmul.f32 %v2787, %v2789
    %v2791 = vadd.f32 %v2787, %v2790
    %vm2792 = vweird.f32 %v2786
    %vm2793 = vweird.f32 %v2787
    %vm2794 = vmor %vm2792, %vm2793
    %v2795 = vsel %vm2794, %v2787, %v2791
    %v2796 = vand.u32 2147483647, %v2786
    %vm2797 = vcmp.eq.f32.partialorder %v2796, 8.507059e+37
    %v2798 = vand.u32 %v2786, 2147483648
    %v2799 = vor.u32 1.1754944e-38, %v2798
    %v2800 = vsel %vm2797, %v2799, %v2795
    %v2801 = vmul.f32 1.0, %v2800
    %v2802 = vtanh.pop %v2780
    %v2803 = vld [vmem:[%s8] sm:$0x3]
    %2805 = vrot.lane.b32.xlu0 %v2803, 32
    %v2806 = vpop.permute.xlu0 %2805
    %v2808 = vmul.f32 %v2801, %v2806
    %2810 = vrot.lane.b32.xlu0 %v2802, 64
    %v2811 = vpop.permute.xlu0 %2810
    %v2813 = vmul.f32 %v2801, %v2811
    %2815 = vrot.lane.b32.xlu0 %v2813, 32
    %v2816 = vpop.permute.xlu0 %2815
    %v2818 = vadd.f32 %v2808, %v2816
    %v2819 = vtanh.pop %v2818
    %2821 = vrot.lane.b32.xlu0 %v2819, 64
    %v2822 = vpop.permute.xlu0 %2821
    %v2824 = vmul.f32 %v2801, %v2822
    %v2825 = vpack.c.bf16 %v2824, %v2824
    %v2826 = vld [vmem:[%s11] sm:$0xff]
    %v2827 = vld [vmem:[%s11 + $0x8] sm:$0xff]
    %v2828 = vld [vmem:[%s11 + $0x10] sm:$0xff]
    %v2829 = vld [vmem:[%s11 + $0x18] sm:$0xff]
    %v2830 = vld [vmem:[%s11 + $0x20] sm:$0xff]
    %v2831 = vld [vmem:[%s11 + $0x28] sm:$0xff]
    %v2832 = vld [vmem:[%s11 + $0x30] sm:$0xff]
    %v2833 = vld [vmem:[%s11 + $0x38] sm:$0xff]
    %v2834 = vld [vmem:[%s11 + $0x40] sm:$0xff]
    %v2835 = vld [vmem:[%s11 + $0x48] sm:$0xff]
    %v2836 = vld [vmem:[%s11 + $0x50] sm:$0xff]
    %v2837 = vld [vmem:[%s11 + $0x58] sm:$0xff]
    %v2838 = vld [vmem:[%s11 + $0x60] sm:$0xf]
    %v2839 = vld [vmem:[%s11 + $0x64] sm:$0xff]
    %v2840 = vld [vmem:[%s11 + $0x6c] sm:$0xff]
    %v2841 = vld [vmem:[%s11 + $0x74] sm:$0xff]
    %v2842 = vld [vmem:[%s11 + $0x7c] sm:$0xff]
    %v2843 = vld [vmem:[%s11 + $0x84] sm:$0xff]
    %v2844 = vld [vmem:[%s11 + $0x8c] sm:$0xff]
    %v2845 = vld [vmem:[%s11 + $0x94] sm:$0xff]
    %v2846 = vld [vmem:[%s11 + $0x9c] sm:$0xff]
    %v2847 = vld [vmem:[%s11 + $0xa4] sm:$0xff]
    %v2848 = vld [vmem:[%s11 + $0xac] sm:$0xff]
    %v2849 = vld [vmem:[%s11 + $0xb4] sm:$0xff]
    %v2850 = vld [vmem:[%s11 + $0xbc] sm:$0xff]
    %v2851 = vld [vmem:[%s11 + $0xc4] sm:$0xf]
    %v2852 = vld [vmem:[%s11 + $0xc8] sm:$0xff]
    %v2853 = vld [vmem:[%s11 + $0xd0] sm:$0xff]
    %v2854 = vld [vmem:[%s11 + $0xd8] sm:$0xff]
    %v2855 = vld [vmem:[%s11 + $0xe0] sm:$0xff]
    %v2856 = vld [vmem:[%s11 + $0xe8] sm:$0xff]
    %v2857 = vld [vmem:[%s11 + $0xf0] sm:$0xff]
    %v2858 = vld [vmem:[%s11 + $0xf8] sm:$0xff]
    %v2859 = vld [vmem:[%s11 + $0x100] sm:$0xff]
    %v2860 = vld [vmem:[%s11 + $0x108] sm:$0xff]
    %v2861 = vld [vmem:[%s11 + $0x110] sm:$0xff]
    %v2862 = vld [vmem:[%s11 + $0x118] sm:$0xff]
    %v2863 = vld [vmem:[%s11 + $0x120] sm:$0xff]
    %v2864 = vld [vmem:[%s11 + $0x128] sm:$0xf]
    %v2865 = vld [vmem:[%s11 + $0x12c] sm:$0xff]
    %v2866 = vld [vmem:[%s11 + $0x134] sm:$0xff]
    %v2867 = vld [vmem:[%s11 + $0x13c] sm:$0xff]
    %v2868 = vld [vmem:[%s11 + $0x144] sm:$0xff]
    %v2869 = vld [vmem:[%s11 + $0x14c] sm:$0xff]
    %v2870 = vld [vmem:[%s11 + $0x154] sm:$0xff]
    %v2871 = vld [vmem:[%s11 + $0x15c] sm:$0xff]
    %v2872 = vld [vmem:[%s11 + $0x164] sm:$0xff]
    %v2873 = vld [vmem:[%s11 + $0x16c] sm:$0xff]
    %v2874 = vld [vmem:[%s11 + $0x174] sm:$0xff]
    %v2875 = vld [vmem:[%s11 + $0x17c] sm:$0xff]
    %v2876 = vld [vmem:[%s11 + $0x184] sm:$0xff]
    %v2877 = vld [vmem:[%s11 + $0x18c] sm:$0xf]
    %v2878 = vld [vmem:[%s12] sm:$0xff]
    %v2879 = vld [vmem:[%s12 + $0x8] sm:$0xff]
    %v2880 = vld [vmem:[%s12 + $0x10] sm:$0xff]
    %v2881 = vld [vmem:[%s12 + $0x18] sm:$0x1]
    %v2886 = vperm.slane %v2878, 0
    %v2887 = vperm.slane %v2878, 1
    %v2888 = vperm.slane %v2878, 2
    %v2889 = vperm.slane %v2878, 3
    %v2890 = vperm.slane %v2878, 4
    %v2891 = vperm.slane %v2878, 5
    %v2892 = vperm.slane %v2878, 6
    %v2893 = vperm.slane %v2878, 7
    %v2894 = vperm.slane %v2879, 0
    %v2895 = vperm.slane %v2879, 1
    %v2896 = vperm.slane %v2879, 2
    %v2897 = vperm.slane %v2879, 3
    %v2898 = vperm.slane %v2879, 4
    %v2899 = vperm.slane %v2879, 5
    %v2900 = vperm.slane %v2879, 6
    %v2901 = vperm.slane %v2879, 7
    %v2902 = vperm.slane %v2880, 0
    %v2903 = vperm.slane %v2880, 1
    %v2904 = vperm.slane %v2880, 2
    %v2905 = vperm.slane %v2880, 3
    %v2906 = vperm.slane %v2880, 4
    %v2907 = vperm.slane %v2880, 5
    %v2908 = vperm.slane %v2880, 6
    %v2909 = vperm.slane %v2880, 7
    %v2910 = vperm.slane %v2881, 0
    %2937 = vrot.lane.b32.xlu0 %v2825, 32
    %v2938 = vpop.permute.xlu0 %2937
    %v2991 = vunpack.c.l.b16 %v2826
    %v2992 = vunpack.c.h.b16 %v2826
    %v2993 = vunpack.c.l.b16 %v2827
    %v2994 = vunpack.c.h.b16 %v2827
    %v2995 = vunpack.c.l.b16 %v2828
    %v2996 = vunpack.c.h.b16 %v2828
    %v2997 = vunpack.c.l.b16 %v2829
    %v2998 = vunpack.c.h.b16 %v2829
    %v2999 = vunpack.c.l.b16 %v2830
    %v3000 = vunpack.c.h.b16 %v2830
    %v3001 = vunpack.c.l.b16 %v2831
    %v3002 = vunpack.c.h.b16 %v2831
    %v3003 = vunpack.c.l.b16 %v2832
    %v3004 = vunpack.c.h.b16 %v2832
    %v3005 = vunpack.c.l.b16 %v2833
    %v3006 = vunpack.c.h.b16 %v2833
    %v3007 = vunpack.c.l.b16 %v2834
    %v3008 = vunpack.c.h.b16 %v2834
    %v3009 = vunpack.c.l.b16 %v2835
    %v3010 = vunpack.c.h.b16 %v2835
    %v3011 = vunpack.c.l.b16 %v2836
    %v3012 = vunpack.c.h.b16 %v2836
    %v3013 = vunpack.c.l.b16 %v2837
    %v3014 = vunpack.c.h.b16 %v2837
    %v3015 = vunpack.c.l.b16 %v2838
    %v3016 = vunpack.c.l.b16 %v2839
    %v3017 = vunpack.c.h.b16 %v2839
    %v3018 = vunpack.c.l.b16 %v2840
    %v3019 = vunpack.c.h.b16 %v2840
    %v3020 = vunpack.c.l.b16 %v2841
    %v3021 = vunpack.c.h.b16 %v2841
    %v3022 = vunpack.c.l.b16 %v2842
    %v3023 = vunpack.c.h.b16 %v2842
    %v3024 = vunpack.c.l.b16 %v2843
    %v3025 = vunpack.c.h.b16 %v2843
    %v3026 = vunpack.c.l.b16 %v2844
    %v3027 = vunpack.c.h.b16 %v2844
    %v3028 = vunpack.c.l.b16 %v2845
    %v3029 = vunpack.c.h.b16 %v2845
    %v3030 = vunpack.c.l.b16 %v2846
    %v3031 = vunpack.c.h.b16 %v2846
    %v3032 = vunpack.c.l.b16 %v2847
    %v3033 = vunpack.c.h.b16 %v2847
    %v3034 = vunpack.c.l.b16 %v2848
    %v3035 = vunpack.c.h.b16 %v2848
    %v3036 = vunpack.c.l.b16 %v2849
    %v3037 = vunpack.c.h.b16 %v2849
    %v3038 = vunpack.c.l.b16 %v2850
    %v3039 = vunpack.c.h.b16 %v2850
    %v3040 = vunpack.c.l.b16 %v2851
    %v3041 = vunpack.c.l.b16 %v2852
    %v3042 = vunpack.c.h.b16 %v2852
    %v3043 = vunpack.c.l.b16 %v2853
    %v3044 = vunpack.c.h.b16 %v2853
    %v3045 = vunpack.c.l.b16 %v2854
    %v3046 = vunpack.c.h.b16 %v2854
    %v3047 = vunpack.c.l.b16 %v2855
    %v3048 = vunpack.c.h.b16 %v2855
    %v3049 = vunpack.c.l.b16 %v2856
    %v3050 = vunpack.c.h.b16 %v2856
    %v3051 = vunpack.c.l.b16 %v2857
    %v3052 = vunpack.c.h.b16 %v2857
    %v3053 = vunpack.c.l.b16 %v2858
    %v3054 = vunpack.c.h.b16 %v2858
    %v3055 = vunpack.c.l.b16 %v2859
    %v3056 = vunpack.c.h.b16 %v2859
    %v3057 = vunpack.c.l.b16 %v2860
    %v3058 = vunpack.c.h.b16 %v2860
    %v3059 = vunpack.c.l.b16 %v2861
    %v3060 = vunpack.c.h.b16 %v2861
    %v3061 = vunpack.c.l.b16 %v2862
    %v3062 = vunpack.c.h.b16 %v2862
    %v3063 = vunpack.c.l.b16 %v2863
    %v3064 = vunpack.c.h.b16 %v2863
    %v3065 = vunpack.c.l.b16 %v2864
    %v3066 = vunpack.c.l.b16 %v2865
    %v3067 = vunpack.c.h.b16 %v2865
    %v3068 = vunpack.c.l.b16 %v2866
    %v3069 = vunpack.c.h.b16 %v2866
    %v3070 = vunpack.c.l.b16 %v2867
    %v3071 = vunpack.c.h.b16 %v2867
    %v3072 = vunpack.c.l.b16 %v2868
    %v3073 = vunpack.c.h.b16 %v2868
    %v3074 = vunpack.c.l.b16 %v2869
    %v3075 = vunpack.c.h.b16 %v2869
    %v3076 = vunpack.c.l.b16 %v2870
    %v3077 = vunpack.c.h.b16 %v2870
    %v3078 = vunpack.c.l.b16 %v2871
    %v3079 = vunpack.c.h.b16 %v2871
    %v3080 = vunpack.c.l.b16 %v2872
    %v3081 = vunpack.c.h.b16 %v2872
    %v3082 = vunpack.c.l.b16 %v2873
    %v3083 = vunpack.c.h.b16 %v2873
    %v3084 = vunpack.c.l.b16 %v2874
    %v3085 = vunpack.c.h.b16 %v2874
    %v3086 = vunpack.c.l.b16 %v2875
    %v3087 = vunpack.c.h.b16 %v2875
    %v3088 = vunpack.c.l.b16 %v2876
    %v3089 = vunpack.c.h.b16 %v2876
    %v3090 = vunpack.c.l.b16 %v2877
    %v3091 = vpack.c.b16 %v3016, %v2991
    %v3092 = vpack.c.b16 %v3017, %v2992
    %v3093 = vpack.c.b16 %v3018, %v2993
    %v3094 = vpack.c.b16 %v3019, %v2994
    %v3095 = vpack.c.b16 %v3020, %v2995
    %v3096 = vpack.c.b16 %v3021, %v2996
    %v3097 = vpack.c.b16 %v3022, %v2997
    %v3098 = vpack.c.b16 %v3023, %v2998
    %v3099 = vpack.c.b16 %v3024, %v2999
    %v3100 = vpack.c.b16 %v3025, %v3000
    %v3101 = vpack.c.b16 %v3026, %v3001
    %v3102 = vpack.c.b16 %v3027, %v3002
    %v3103 = vpack.c.b16 %v3028, %v3003
    %v3104 = vpack.c.b16 %v3029, %v3004
    %v3105 = vpack.c.b16 %v3030, %v3005
    %v3106 = vpack.c.b16 %v3031, %v3006
    %v3107 = vpack.c.b16 %v3032, %v3007
    %v3108 = vpack.c.b16 %v3033, %v3008
    %v3109 = vpack.c.b16 %v3034, %v3009
    %v3110 = vpack.c.b16 %v3035, %v3010
    %v3111 = vpack.c.b16 %v3036, %v3011
    %v3112 = vpack.c.b16 %v3037, %v3012
    %v3113 = vpack.c.b16 %v3038, %v3013
    %v3114 = vpack.c.b16 %v3039, %v3014
    %v3115 = vpack.c.b16 %v3040, %v3015
    %v3116 = vpack.c.b16 %v3066, %v3041
    %v3117 = vpack.c.b16 %v3067, %v3042
    %v3118 = vpack.c.b16 %v3068, %v3043
    %v3119 = vpack.c.b16 %v3069, %v3044
    %v3120 = vpack.c.b16 %v3070, %v3045
    %v3121 = vpack.c.b16 %v3071, %v3046
    %v3122 = vpack.c.b16 %v3072, %v3047
    %v3123 = vpack.c.b16 %v3073, %v3048
    %v3124 = vpack.c.b16 %v3074, %v3049
    %v3125 = vpack.c.b16 %v3075, %v3050
    %v3126 = vpack.c.b16 %v3076, %v3051
    %v3127 = vpack.c.b16 %v3077, %v3052
    %v3128 = vpack.c.b16 %v3078, %v3053
    %v3129 = vpack.c.b16 %v3079, %v3054
    %v3130 = vpack.c.b16 %v3080, %v3055
    %v3131 = vpack.c.b16 %v3081, %v3056
    %v3132 = vpack.c.b16 %v3082, %v3057
    %v3133 = vpack.c.b16 %v3083, %v3058
    %v3134 = vpack.c.b16 %v3084, %v3059
    %v3135 = vpack.c.b16 %v3085, %v3060
    %v3136 = vpack.c.b16 %v3086, %v3061
    %v3137 = vpack.c.b16 %v3087, %v3062
    %v3138 = vpack.c.b16 %v3088, %v3063
    %v3139 = vpack.c.b16 %v3089, %v3064
    %v3140 = vpack.c.b16 %v3090, %v3065
    %v3192 = vsel %vm2652, %v2938, 0
    %3194 = vmatpush.bf16.msra.mxu0 0
    %3195 = vmatpush.bf16.msra.mxu0 0
    %3196 = vmatpush.bf16.msra.mxu0 0
    %3197 = vmatpush.bf16.msra.mxu0 0
    %3198 = vmatpush.bf16.msra.mxu0 0
    %3199 = vmatpush.bf16.msra.mxu0 0
    %3200 = vmatpush.bf16.msra.mxu0 %v3116
    %3201 = vmatpush.bf16.msra.mxu0 %v3091
    %3202 = vmatmul.bf16.gmra.mxu0 %v3192
    %v3203 = vpop.f32.mrf.mxu0
    %v3204 = vadd.f32 %v2886, %v3203
    %v3205 = vpop.f32.mrf.mxu0
    %3206 = vdwg.mxu0
    %3207 = vmatpush.bf16.msra.mxu0 0
    %3208 = vmatpush.bf16.msra.mxu0 0
    %3209 = vmatpush.bf16.msra.mxu0 0
    %3210 = vmatpush.bf16.msra.mxu0 0
    %3211 = vmatpush.bf16.msra.mxu0 0
    %3212 = vmatpush.bf16.msra.mxu0 0
    %3213 = vmatpush.bf16.msra.mxu0 %v3117
    %3214 = vmatpush.bf16.msra.mxu0 %v3092
    %3215 = vmatmul.bf16.gmra.mxu0 %v3192
    %v3216 = vpop.f32.mrf.mxu0
    %v3217 = vadd.f32 %v2887, %v3216
    %v3218 = vpop.f32.mrf.mxu0
    %3219 = vdwg.mxu0
    %3220 = vmatpush.bf16.msra.mxu0 0
    %3221 = vmatpush.bf16.msra.mxu0 0
    %3222 = vmatpush.bf16.msra.mxu0 0
    %3223 = vmatpush.bf16.msra.mxu0 0
    %3224 = vmatpush.bf16.msra.mxu0 0
    %3225 = vmatpush.bf16.msra.mxu0 0
    %3226 = vmatpush.bf16.msra.mxu0 %v3118
    %3227 = vmatpush.bf16.msra.mxu0 %v3093
    %3228 = vmatmul.bf16.gmra.mxu0 %v3192
    %v3229 = vpop.f32.mrf.mxu0
    %v3230 = vadd.f32 %v2888, %v3229
    %v3231 = vpop.f32.mrf.mxu0
    %3232 = vdwg.mxu0
    %3233 = vmatpush.bf16.msra.mxu0 0
    %3234 = vmatpush.bf16.msra.mxu0 0
    %3235 = vmatpush.bf16.msra.mxu0 0
    %3236 = vmatpush.bf16.msra.mxu0 0
    %3237 = vmatpush.bf16.msra.mxu0 0
    %3238 = vmatpush.bf16.msra.mxu0 0
    %3239 = vmatpush.bf16.msra.mxu0 %v3119
    %3240 = vmatpush.bf16.msra.mxu0 %v3094
    %3241 = vmatmul.bf16.gmra.mxu0 %v3192
    %v3242 = vpop.f32.mrf.mxu0
    %v3243 = vadd.f32 %v2889, %v3242
    %v3244 = vpop.f32.mrf.mxu0
    %3245 = vdwg.mxu0
    %3246 = vmatpush.bf16.msra.mxu0 0
    %3247 = vmatpush.bf16.msra.mxu0 0
    %3248 = vmatpush.bf16.msra.mxu0 0
    %3249 = vmatpush.bf16.msra.mxu0 0
    %3250 = vmatpush.bf16.msra.mxu0 0
    %3251 = vmatpush.bf16.msra.mxu0 0
    %3252 = vmatpush.bf16.msra.mxu0 %v3120
    %3253 = vmatpush.bf16.msra.mxu0 %v3095
    %3254 = vmatmul.bf16.gmra.mxu0 %v3192
    %v3255 = vpop.f32.mrf.mxu0
    %v3256 = vadd.f32 %v2890, %v3255
    %v3257 = vpop.f32.mrf.mxu0
    %3258 = vdwg.mxu0
    %3259 = vmatpush.bf16.msra.mxu0 0
    %3260 = vmatpush.bf16.msra.mxu0 0
    %3261 = vmatpush.bf16.msra.mxu0 0
    %3262 = vmatpush.bf16.msra.mxu0 0
    %3263 = vmatpush.bf16.msra.mxu0 0
    %3264 = vmatpush.bf16.msra.mxu0 0
    %3265 = vmatpush.bf16.msra.mxu0 %v3121
    %3266 = vmatpush.bf16.msra.mxu0 %v3096
    %3267 = vmatmul.bf16.gmra.mxu0 %v3192
    %v3268 = vpop.f32.mrf.mxu0
    %v3269 = vadd.f32 %v2891, %v3268
    %v3270 = vpop.f32.mrf.mxu0
    %3271 = vdwg.mxu0
    %3272 = vmatpush.bf16.msra.mxu0 0
    %3273 = vmatpush.bf16.msra.mxu0 0
    %3274 = vmatpush.bf16.msra.mxu0 0
    %3275 = vmatpush.bf16.msra.mxu0 0
    %3276 = vmatpush.bf16.msra.mxu0 0
    %3277 = vmatpush.bf16.msra.mxu0 0
    %3278 = vmatpush.bf16.msra.mxu0 %v3122
    %3279 = vmatpush.bf16.msra.mxu0 %v3097
    %3280 = vmatmul.bf16.gmra.mxu0 %v3192
    %v3281 = vpop.f32.mrf.mxu0
    %v3282 = vadd.f32 %v2892, %v3281
    %v3283 = vpop.f32.mrf.mxu0
    %3284 = vdwg.mxu0
    %3285 = vmatpush.bf16.msra.mxu0 0
    %3286 = vmatpush.bf16.msra.mxu0 0
    %3287 = vmatpush.bf16.msra.mxu0 0
    %3288 = vmatpush.bf16.msra.mxu0 0
    %3289 = vmatpush.bf16.msra.mxu0 0
    %3290 = vmatpush.bf16.msra.mxu0 0
    %3291 = vmatpush.bf16.msra.mxu0 %v3123
    %3292 = vmatpush.bf16.msra.mxu0 %v3098
    %3293 = vmatmul.bf16.gmra.mxu0 %v3192
    %v3294 = vpop.f32.mrf.mxu0
    %v3295 = vadd.f32 %v2893, %v3294
    %v3296 = vpop.f32.mrf.mxu0
    %3297 = vdwg.mxu0
    %3298 = vmatpush.bf16.msra.mxu0 0
    %3299 = vmatpush.bf16.msra.mxu0 0
    %3300 = vmatpush.bf16.msra.mxu0 0
    %3301 = vmatpush.bf16.msra.mxu0 0
    %3302 = vmatpush.bf16.msra.mxu0 0
    %3303 = vmatpush.bf16.msra.mxu0 0
    %3304 = vmatpush.bf16.msra.mxu0 %v3124
    %3305 = vmatpush.bf16.msra.mxu0 %v3099
    %3306 = vmatmul.bf16.gmra.mxu0 %v3192
    %v3307 = vpop.f32.mrf.mxu0
    %v3308 = vadd.f32 %v2894, %v3307
    %v3309 = vpop.f32.mrf.mxu0
    %3310 = vdwg.mxu0
    %3311 = vmatpush.bf16.msra.mxu0 0
    %3312 = vmatpush.bf16.msra.mxu0 0
    %3313 = vmatpush.bf16.msra.mxu0 0
    %3314 = vmatpush.bf16.msra.mxu0 0
    %3315 = vmatpush.bf16.msra.mxu0 0
    %3316 = vmatpush.bf16.msra.mxu0 0
    %3317 = vmatpush.bf16.msra.mxu0 %v3125
    %3318 = vmatpush.bf16.msra.mxu0 %v3100
    %3319 = vmatmul.bf16.gmra.mxu0 %v3192
    %v3320 = vpop.f32.mrf.mxu0
    %v3321 = vadd.f32 %v2895, %v3320
    %v3322 = vpop.f32.mrf.mxu0
    %3323 = vdwg.mxu0
    %3324 = vmatpush.bf16.msra.mxu0 0
    %3325 = vmatpush.bf16.msra.mxu0 0
    %3326 = vmatpush.bf16.msra.mxu0 0
    %3327 = vmatpush.bf16.msra.mxu0 0
    %3328 = vmatpush.bf16.msra.mxu0 0
    %3329 = vmatpush.bf16.msra.mxu0 0
    %3330 = vmatpush.bf16.msra.mxu0 %v3126
    %3331 = vmatpush.bf16.msra.mxu0 %v3101
    %3332 = vmatmul.bf16.gmra.mxu0 %v3192
    %v3333 = vpop.f32.mrf.mxu0
    %v3334 = vadd.f32 %v2896, %v3333
    %v3335 = vpop.f32.mrf.mxu0
    %3336 = vdwg.mxu0
    %3337 = vmatpush.bf16.msra.mxu0 0
    %3338 = vmatpush.bf16.msra.mxu0 0
    %3339 = vmatpush.bf16.msra.mxu0 0
    %3340 = vmatpush.bf16.msra.mxu0 0
    %3341 = vmatpush.bf16.msra.mxu0 0
    %3342 = vmatpush.bf16.msra.mxu0 0
    %3343 = vmatpush.bf16.msra.mxu0 %v3127
    %3344 = vmatpush.bf16.msra.mxu0 %v3102
    %3345 = vmatmul.bf16.gmra.mxu0 %v3192
    %v3346 = vpop.f32.mrf.mxu0
    %v3347 = vadd.f32 %v2897, %v3346
    %v3348 = vpop.f32.mrf.mxu0
    %3349 = vdwg.mxu0
    %3350 = vmatpush.bf16.msra.mxu0 0
    %3351 = vmatpush.bf16.msra.mxu0 0
    %3352 = vmatpush.bf16.msra.mxu0 0
    %3353 = vmatpush.bf16.msra.mxu0 0
    %3354 = vmatpush.bf16.msra.mxu0 0
    %3355 = vmatpush.bf16.msra.mxu0 0
    %3356 = vmatpush.bf16.msra.mxu0 %v3128
    %3357 = vmatpush.bf16.msra.mxu0 %v3103
    %3358 = vmatmul.bf16.gmra.mxu0 %v3192
    %v3359 = vpop.f32.mrf.mxu0
    %v3360 = vadd.f32 %v2898, %v3359
    %v3361 = vpop.f32.mrf.mxu0
    %3362 = vdwg.mxu0
    %3363 = vmatpush.bf16.msra.mxu0 0
    %3364 = vmatpush.bf16.msra.mxu0 0
    %3365 = vmatpush.bf16.msra.mxu0 0
    %3366 = vmatpush.bf16.msra.mxu0 0
    %3367 = vmatpush.bf16.msra.mxu0 0
    %3368 = vmatpush.bf16.msra.mxu0 0
    %3369 = vmatpush.bf16.msra.mxu0 %v3129
    %3370 = vmatpush.bf16.msra.mxu0 %v3104
    %3371 = vmatmul.bf16.gmra.mxu0 %v3192
    %v3372 = vpop.f32.mrf.mxu0
    %v3373 = vadd.f32 %v2899, %v3372
    %v3374 = vpop.f32.mrf.mxu0
    %3375 = vdwg.mxu0
    %3376 = vmatpush.bf16.msra.mxu0 0
    %3377 = vmatpush.bf16.msra.mxu0 0
    %3378 = vmatpush.bf16.msra.mxu0 0
    %3379 = vmatpush.bf16.msra.mxu0 0
    %3380 = vmatpush.bf16.msra.mxu0 0
    %3381 = vmatpush.bf16.msra.mxu0 0
    %3382 = vmatpush.bf16.msra.mxu0 %v3130
    %3383 = vmatpush.bf16.msra.mxu0 %v3105
    %3384 = vmatmul.bf16.gmra.mxu0 %v3192
    %v3385 = vpop.f32.mrf.mxu0
    %v3386 = vadd.f32 %v2900, %v3385
    %v3387 = vpop.f32.mrf.mxu0
    %3388 = vdwg.mxu0
    %3389 = vmatpush.bf16.msra.mxu0 0
    %3390 = vmatpush.bf16.msra.mxu0 0
    %3391 = vmatpush.bf16.msra.mxu0 0
    %3392 = vmatpush.bf16.msra.mxu0 0
    %3393 = vmatpush.bf16.msra.mxu0 0
    %3394 = vmatpush.bf16.msra.mxu0 0
    %3395 = vmatpush.bf16.msra.mxu0 %v3131
    %3396 = vmatpush.bf16.msra.mxu0 %v3106
    %3397 = vmatmul.bf16.gmra.mxu0 %v3192
    %v3398 = vpop.f32.mrf.mxu0
    %v3399 = vadd.f32 %v2901, %v3398
    %v3400 = vpop.f32.mrf.mxu0
    %3401 = vdwg.mxu0
    %3402 = vmatpush.bf16.msra.mxu0 0
    %3403 = vmatpush.bf16.msra.mxu0 0
    %3404 = vmatpush.bf16.msra.mxu0 0
    %3405 = vmatpush.bf16.msra.mxu0 0
    %3406 = vmatpush.bf16.msra.mxu0 0
    %3407 = vmatpush.bf16.msra.mxu0 0
    %3408 = vmatpush.bf16.msra.mxu0 %v3132
    %3409 = vmatpush.bf16.msra.mxu0 %v3107
    %3410 = vmatmul.bf16.gmra.mxu0 %v3192
    %v3411 = vpop.f32.mrf.mxu0
    %v3412 = vadd.f32 %v2902, %v3411
    %v3413 = vpop.f32.mrf.mxu0
    %3414 = vdwg.mxu0
    %3415 = vmatpush.bf16.msra.mxu0 0
    %3416 = vmatpush.bf16.msra.mxu0 0
    %3417 = vmatpush.bf16.msra.mxu0 0
    %3418 = vmatpush.bf16.msra.mxu0 0
    %3419 = vmatpush.bf16.msra.mxu0 0
    %3420 = vmatpush.bf16.msra.mxu0 0
    %3421 = vmatpush.bf16.msra.mxu0 %v3133
    %3422 = vmatpush.bf16.msra.mxu0 %v3108
    %3423 = vmatmul.bf16.gmra.mxu0 %v3192
    %v3424 = vpop.f32.mrf.mxu0
    %v3425 = vadd.f32 %v2903, %v3424
    %v3426 = vpop.f32.mrf.mxu0
    %3427 = vdwg.mxu0
    %3428 = vmatpush.bf16.msra.mxu0 0
    %3429 = vmatpush.bf16.msra.mxu0 0
    %3430 = vmatpush.bf16.msra.mxu0 0
    %3431 = vmatpush.bf16.msra.mxu0 0
    %3432 = vmatpush.bf16.msra.mxu0 0
    %3433 = vmatpush.bf16.msra.mxu0 0
    %3434 = vmatpush.bf16.msra.mxu0 %v3134
    %3435 = vmatpush.bf16.msra.mxu0 %v3109
    %3436 = vmatmul.bf16.gmra.mxu0 %v3192
    %v3437 = vpop.f32.mrf.mxu0
    %v3438 = vadd.f32 %v2904, %v3437
    %v3439 = vpop.f32.mrf.mxu0
    %3440 = vdwg.mxu0
    %3441 = vmatpush.bf16.msra.mxu0 0
    %3442 = vmatpush.bf16.msra.mxu0 0
    %3443 = vmatpush.bf16.msra.mxu0 0
    %3444 = vmatpush.bf16.msra.mxu0 0
    %3445 = vmatpush.bf16.msra.mxu0 0
    %3446 = vmatpush.bf16.msra.mxu0 0
    %3447 = vmatpush.bf16.msra.mxu0 %v3135
    %3448 = vmatpush.bf16.msra.mxu0 %v3110
    %3449 = vmatmul.bf16.gmra.mxu0 %v3192
    %v3450 = vpop.f32.mrf.mxu0
    %v3451 = vadd.f32 %v2905, %v3450
    %v3452 = vpop.f32.mrf.mxu0
    %3453 = vdwg.mxu0
    %3454 = vmatpush.bf16.msra.mxu0 0
    %3455 = vmatpush.bf16.msra.mxu0 0
    %3456 = vmatpush.bf16.msra.mxu0 0
    %3457 = vmatpush.bf16.msra.mxu0 0
    %3458 = vmatpush.bf16.msra.mxu0 0
    %3459 = vmatpush.bf16.msra.mxu0 0
    %3460 = vmatpush.bf16.msra.mxu0 %v3136
    %3461 = vmatpush.bf16.msra.mxu0 %v3111
    %3462 = vmatmul.bf16.gmra.mxu0 %v3192
    %v3463 = vpop.f32.mrf.mxu0
    %v3464 = vadd.f32 %v2906, %v3463
    %v3465 = vpop.f32.mrf.mxu0
    %3466 = vdwg.mxu0
    %3467 = vmatpush.bf16.msra.mxu0 0
    %3468 = vmatpush.bf16.msra.mxu0 0
    %3469 = vmatpush.bf16.msra.mxu0 0
    %3470 = vmatpush.bf16.msra.mxu0 0
    %3471 = vmatpush.bf16.msra.mxu0 0
    %3472 = vmatpush.bf16.msra.mxu0 0
    %3473 = vmatpush.bf16.msra.mxu0 %v3137
    %3474 = vmatpush.bf16.msra.mxu0 %v3112
    %3475 = vmatmul.bf16.gmra.mxu0 %v3192
    %v3476 = vpop.f32.mrf.mxu0
    %v3477 = vadd.f32 %v2907, %v3476
    %v3478 = vpop.f32.mrf.mxu0
    %3479 = vdwg.mxu0
    %3480 = vmatpush.bf16.msra.mxu0 0
    %3481 = vmatpush.bf16.msra.mxu0 0
    %3482 = vmatpush.bf16.msra.mxu0 0
    %3483 = vmatpush.bf16.msra.mxu0 0
    %3484 = vmatpush.bf16.msra.mxu0 0
    %3485 = vmatpush.bf16.msra.mxu0 0
    %3486 = vmatpush.bf16.msra.mxu0 %v3138
    %3487 = vmatpush.bf16.msra.mxu0 %v3113
    %3488 = vmatmul.bf16.gmra.mxu0 %v3192
    %v3489 = vpop.f32.mrf.mxu0
    %v3490 = vadd.f32 %v2908, %v3489
    %v3491 = vpop.f32.mrf.mxu0
    %3492 = vdwg.mxu0
    %3493 = vmatpush.bf16.msra.mxu0 0
    %3494 = vmatpush.bf16.msra.mxu0 0
    %3495 = vmatpush.bf16.msra.mxu0 0
    %3496 = vmatpush.bf16.msra.mxu0 0
    %3497 = vmatpush.bf16.msra.mxu0 0
    %3498 = vmatpush.bf16.msra.mxu0 0
    %3499 = vmatpush.bf16.msra.mxu0 %v3139
    %3500 = vmatpush.bf16.msra.mxu0 %v3114
    %3501 = vmatmul.bf16.gmra.mxu0 %v3192
    %v3502 = vpop.f32.mrf.mxu0
    %v3503 = vadd.f32 %v2909, %v3502
    %v3504 = vpop.f32.mrf.mxu0
    %3505 = vdwg.mxu0
    %3506 = vmatpush.bf16.msra.mxu0 0
    %3507 = vmatpush.bf16.msra.mxu0 0
    %3508 = vmatpush.bf16.msra.mxu0 0
    %3509 = vmatpush.bf16.msra.mxu0 0
    %3510 = vmatpush.bf16.msra.mxu0 0
    %3511 = vmatpush.bf16.msra.mxu0 0
    %3512 = vmatpush.bf16.msra.mxu0 %v3140
    %3513 = vmatpush.bf16.msra.mxu0 %v3115
    %3514 = vmatmul.bf16.gmra.mxu0 %v3192
    %v3515 = vpop.f32.mrf.mxu0
    %v3516 = vadd.f32 %v2910, %v3515
    %v3517 = vpop.f32.mrf.mxu0
    %3518 = vdwg.mxu0
    %v3519 = vmax.f32 %v3204, 0.0
    %v3520 = vmax.f32 %v3217, 0.0
    %v3521 = vmax.f32 %v3230, 0.0
    %v3522 = vmax.f32 %v3243, 0.0
    %v3523 = vmax.f32 %v3256, 0.0
    %v3524 = vmax.f32 %v3269, 0.0
    %v3525 = vmax.f32 %v3282, 0.0
    %v3526 = vmax.f32 %v3295, 0.0
    %v3527 = vmax.f32 %v3308, 0.0
    %v3528 = vmax.f32 %v3321, 0.0
    %v3529 = vmax.f32 %v3334, 0.0
    %v3530 = vmax.f32 %v3347, 0.0
    %v3531 = vmax.f32 %v3360, 0.0
    %v3532 = vmax.f32 %v3373, 0.0
    %v3533 = vmax.f32 %v3386, 0.0
    %v3534 = vmax.f32 %v3399, 0.0
    %v3535 = vmax.f32 %v3412, 0.0
    %v3536 = vmax.f32 %v3425, 0.0
    %v3537 = vmax.f32 %v3438, 0.0
    %v3538 = vmax.f32 %v3451, 0.0
    %v3539 = vmax.f32 %v3464, 0.0
    %v3540 = vmax.f32 %v3477, 0.0
    %v3541 = vmax.f32 %v3490, 0.0
    %v3542 = vmax.f32 %v3503, 0.0
    %v3543 = vmax.f32 %v3516, 0.0
    %v3568 = vrot.slane %v3520, 6
    %v3569 = vrot.slane %v3521, 4
    %v3570 = vrot.slane %v3522, 2
    %v3571 = vrot.slane %v3524, 6
    %v3572 = vrot.slane %v3525, 4
    %v3573 = vrot.slane %v3526, 2
    %v3574 = vrot.slane %v3528, 6
    %v3575 = vrot.slane %v3529, 4
    %v3576 = vrot.slane %v3530, 2
    %v3577 = vrot.slane %v3532, 6
    %v3578 = vrot.slane %v3533, 4
    %v3579 = vrot.slane %v3534, 2
    %v3580 = vrot.slane %v3536, 6
    %v3581 = vrot.slane %v3537, 4
    %v3582 = vrot.slane %v3538, 2
    %v3583 = vrot.slane %v3540, 6
    %v3584 = vrot.slane %v3541, 4
    %v3585 = vrot.slane %v3542, 2
    %v3586 = vsel %vm2621, %v3519, %v3568
    %vm3587 = vcmask 1045508
    %v3588 = vsel %vm3587, %v3569, %v3570
    %vm3589 = vcmask 1043456
    %v3590 = vsel %vm3589, %v3586, %v3588
    %v3591 = vsel %vm2621, %v3523, %v3571
    %v3592 = vsel %vm3587, %v3572, %v3573
    %v3593 = vsel %vm3589, %v3591, %v3592
    %v3594 = vsel %vm2621, %v3527, %v3574
    %v3595 = vsel %vm3587, %v3575, %v3576
    %v3596 = vsel %vm3589, %v3594, %v3595
    %v3597 = vsel %vm2621, %v3531, %v3577
    %v3598 = vsel %vm3587, %v3578, %v3579
    %v3599 = vsel %vm3589, %v3597, %v3598
    %v3600 = vsel %vm2621, %v3535, %v3580
    %v3601 = vsel %vm3587, %v3581, %v3582
    %v3602 = vsel %vm3589, %v3600, %v3601
    %v3603 = vsel %vm2621, %v3539, %v3583
    %v3604 = vsel %vm3587, %v3584, %v3585
    %v3605 = vsel %vm3589, %v3603, %v3604
    %3612 = vst [vmem:[%s13] sm:$0xff] %v3590
    %3613 = vst [vmem:[%s13 + $0x8] sm:$0xff] %v3593
    %3614 = vst [vmem:[%s13 + $0x10] sm:$0xff] %v3596
    %3615 = vst [vmem:[%s13 + $0x18] sm:$0xff] %v3599
    %3616 = vst [vmem:[%s13 + $0x20] sm:$0xff] %v3602
    %3617 = vst [vmem:[%s13 + $0x28] sm:$0xff] %v3605
    %3618 = vst [vmem:[%s13 + $0x30] sm:$0x3] %v3543
    %3620 = vrot.lane.b32.xlu0 %v2824, 32
    %v3621 = vpop.permute.xlu0 %3620
    %vm3623 = vcmask 254976
    %3624 = vst.msk [vmem:[#allocation2] sm:$0x3] %vm3623, %v3621
    %3626 = vrot.lane.b32.xlu0 %v2818, 96
    %v3627 = vpop.permute.xlu0 %3626
    %3629 = vst.msk [vmem:[%s15] sm:$0x3] %vm3623, %v3627
    // Predicated region
    $region54: #{resnet_depth_map_forward.1} parent=1 // pred_check
      _
    $region55: #{resnet_depth_map_forward.1} parent=1 // pred_check_branch
      %3631 = sbr.rel (0) target = $region57
    $region56: #{resnet_depth_map_forward.1} parent=1 // pred_region
      _
    $region57: #{resnet_depth_map_forward.1} parent=1 // pred_fallthru
      _
    // Predicated region
    $region58: #{resnet_depth_map_forward.1} parent=1 // pred_check
      _
    $region59: #{resnet_depth_map_forward.1} parent=1 // pred_check_branch
      %3633 = sbr.rel (0) target = $region61
    $region60: #{resnet_depth_map_forward.1} parent=1 // pred_region
      %3635 = vsyncadd [#allocation3], 0
      %s3637 = sshll.u32 [#allocation2], 4
      %s3638 = int_to_ptr.vmem [resolvable:$true] %s3637
      %s3639 = sshll.u32 %s14, 4
      %s3640 = int_to_ptr.hbm [resolvable:$true] %s3639
      %3642 = dma.vmem_to_hbm [thread:$0]  %s3638, 32, %s3640, [#allocation3]
    $region61: #{resnet_depth_map_forward.1} parent=1 // pred_fallthru
      _
    // Predicated region
    $region62: #{resnet_depth_map_forward.1} parent=1 // pred_check
      _
    $region63: #{resnet_depth_map_forward.1} parent=1 // pred_check_branch
      %3644 = sbr.rel (0) target = $region65
    $region64: #{resnet_depth_map_forward.1} parent=1 // pred_region
      _
    $region65: #{resnet_depth_map_forward.1} parent=1 // pred_fallthru
      _
    // Predicated region
    $region66: #{resnet_depth_map_forward.1} parent=1 // pred_check
      _
    $region67: #{resnet_depth_map_forward.1} parent=1 // pred_check_branch
      %3646 = sbr.rel (0) target = $region69
    $region68: #{resnet_depth_map_forward.1} parent=1 // pred_region
      _
    $region69: #{resnet_depth_map_forward.1} parent=1 // pred_fallthru
      _
    // Predicated region
    $region70: #{resnet_depth_map_forward.1} parent=1 // pred_check
      _
    $region71: #{resnet_depth_map_forward.1} parent=1 // pred_check_branch
      %3648 = sbr.rel (0) target = $region73
    $region72: #{resnet_depth_map_forward.1} parent=1 // pred_region
      %3650 = dma.done [#allocation3], 32
    $region73: #{resnet_depth_map_forward.1} parent=1 // pred_fallthru
      _
    // Predicated region
    $region74: #{resnet_depth_map_forward.1} parent=1 // pred_check
      _
    $region75: #{resnet_depth_map_forward.1} parent=1 // pred_check_branch
      %3652 = sbr.rel (0) target = $region77
    $region76: #{resnet_depth_map_forward.1} parent=1 // pred_region
      _
    $region77: #{resnet_depth_map_forward.1} parent=1 // pred_fallthru
      _
    %3653 = vsyncpa [#allocation3], 1

</llo_original>
